<compile_context>
chip_gen: v5e
topology: v5e:2x2
jax: 0.10.0
libtpu: 0.0.40
codegen_flags: <defaults>
</compile_context>

<pallas_src>
import jax
import jax.numpy as jnp
from jax.experimental import pallas as pl
from jax.experimental.pallas import tpu as pltpu

# ---- small, module-consistent sizes (scaled-down Encoder_GRU hyperparameters) ----
INPUTS_SIZE = 16     # was 154
MATRIX_DIM = 8       # was 144 (Conv1d input channels)
HIDDEN_SIZE = 8      # was 20
TARGETS_SIZE = 16    # was 154
LOGITS_SIZE = 4      # was 10
NUM_LAYERS = 2
KERNEL_WINS = (3, 4, 5)
MATRIX_LEN = 12      # Conv1d spatial length (>= max kernel win)
SEQ_LEN = 4          # L
BATCH = 2            # N

SLAB_COLS = 128                              # lane width of packed weight slab / output
NB_PAD = 8                                   # batch padded to one full sublane tile
L_PAD = 16                                   # padded conv output length (mult. of 8, >= 10)
DATA_COLS = max(KERNEL_WINS) * MATRIX_DIM    # shared im2col data columns (40)
NW = len(KERNEL_WINS)
X_COLS = DATA_COLS + NW                      # + per-window pad/off-window indicator cols
NEG_BIG = -1e30                              # finite "minus infinity" for the max-pool mask


# --------------------------------------------------------------------------------
# Parameter construction (deterministic, synthetic) — same structure as before
# --------------------------------------------------------------------------------
def init_params(key):
    keys = iter(jax.random.split(key, 64))

    def w(shape, scale=0.15):
        return scale * jax.random.normal(next(keys), shape, jnp.float32)

    def cnn_params():
        # per conv: weight [k, C_in, logit] (PyTorch [logit, C_in, k] transposed), bias [1, logit]
        convs = [(w((k, MATRIX_DIM, LOGITS_SIZE)), w((1, LOGITS_SIZE))) for k in KERNEL_WINS]
        return dict(convs=convs,
                    fcW=w((NW * LOGITS_SIZE, LOGITS_SIZE)),
                    fcb=w((1, LOGITS_SIZE)))

    def gru_params(in_dim):
        # Wi: [3(r,z,n), in_dim, H], bi: [3,1,H], Wh: [2(r,n), H, H], bh: [2,1,H]
        # (z_layer_h is unused in the original forward, so it is not materialized)
        return (w((3, in_dim, HIDDEN_SIZE)), w((3, 1, HIDDEN_SIZE)),
                w((2, HIDDEN_SIZE, HIDDEN_SIZE)), w((2, 1, HIDDEN_SIZE)))

    d0 = INPUTS_SIZE + LOGITS_SIZE
    return dict(
        enc=cnn_params(),            # self.encoder
        dec_enc=cnn_params(),        # self.decoder.encoder
        gru_up=[gru_params(d0), gru_params(HIDDEN_SIZE)],    # self.myGRUCell
        gru_dec=[gru_params(d0), gru_params(HIDDEN_SIZE)],   # self.decoder.myGRUCell
        mlpW=w((HIDDEN_SIZE, TARGETS_SIZE)),
        mlpb=w((1, TARGETS_SIZE)),
    )


# --------------------------------------------------------------------------------
# One-time weight packing into a single lane-dense [R, 128] f32 slab.
# Row offsets are 8-aligned so every in-kernel slice is sublane-aligned.
# --------------------------------------------------------------------------------
def pack_params(params):
    H, LG, NI, C = HIDDEN_SIZE, LOGITS_SIZE, INPUTS_SIZE, MATRIX_DIM
    f32 = jnp.float32

    def fuse_wi(wi):   # [3, d, H] -> [d, 3H], columns (r | z | n)
        return jnp.concatenate([wi[0], wi[1], wi[2]], axis=1)

    def fuse_bi(bi):
        return jnp.concatenate([bi[0], bi[1], bi[2]], axis=1)

    def fuse_wh(wh):   # [2, H, H] -> [H, 3H], columns (r | r | n): bug-compatible z gate
        return jnp.concatenate([wh[0], wh[0], wh[1]], axis=1)

    def fuse_bh(bh):
        return jnp.concatenate([bh[0], bh[0], bh[1]], axis=1)

    def blockdiag(a, b):
        top = jnp.concatenate([a, jnp.zeros((a.shape[0], b.shape[1]), f32)], axis=1)
        bot = jnp.concatenate([jnp.zeros((b.shape[0], a.shape[1]), f32), b], axis=1)
        return jnp.concatenate([top, bot], axis=0)

    # --- conv: one im2col weight covering all 3 windows and BOTH encoders ---------
    conv_w = jnp.zeros((X_COLS, NW * 2 * LG), f32)
    conv_b = jnp.zeros((1, NW * 2 * LG), f32)
    for ki, k in enumerate(KERNEL_WINS):
        w_enc, b_enc = params["enc"]["convs"][ki]          # [k, C, LG], [1, LG]
        w_dec, b_dec = params["dec_enc"]["convs"][ki]
        wk = jnp.concatenate([w_enc.reshape(k * C, LG),
                              w_dec.reshape(k * C, LG)], axis=1)          # [k*C, 2LG]
        c0 = ki * 2 * LG
        conv_w = conv_w.at[:k * C, c0:c0 + 2 * LG].set(wk)
        # penalty row: indicator column ki pushes this window's output block to -1e30
        # for pad rows / rows belonging to a different window (enables one fused max-pool).
        conv_w = conv_w.at[DATA_COLS + ki, c0:c0 + 2 * LG].set(NEG_BIG)
        conv_b = conv_b.at[:, c0:c0 + LG].set(b_enc)
        conv_b = conv_b.at[:, c0 + LG:c0 + 2 * LG].set(b_dec)

    # --- fc of both encoders pre-composed with the consumers of logits / features ---
    # pooled column order is (k3 enc|dec, k4 enc|dec, k5 enc|dec); permutation matrices
    # map it to the [k3|k4|k5] per-encoder order the fc layers expect.
    enc_perm = jnp.zeros((NW * 2 * LG, NW * LG), f32)
    dec_perm = jnp.zeros((NW * 2 * LG, NW * LG), f32)
    for ki in range(NW):
        for o in range(LG):
            enc_perm = enc_perm.at[ki * 2 * LG + o, ki * LG + o].set(1.0)
            dec_perm = dec_perm.at[ki * 2 * LG + LG + o, ki * LG + o].set(1.0)

    up0_wi, up0_bi = fuse_wi(params["gru_up"][0][0]), fuse_bi(params["gru_up"][0][1])
    dec0_wi, dec0_bi = fuse_wi(params["gru_dec"][0][0]), fuse_bi(params["gru_dec"][0][1])

    # base0 = logits @ Wi_up0[logits part] + bi_up0 ; dfeat = features @ Wi_dec0[feat part] + bi_dec0
    w_logits = (enc_perm @ params["enc"]["fcW"]) @ up0_wi[NI:, :]
    b_logits = params["enc"]["fcb"] @ up0_wi[NI:, :] + up0_bi
    w_feat = (dec_perm @ params["dec_enc"]["fcW"]) @ dec0_wi[NI:, :]
    b_feat = params["dec_enc"]["fcb"] @ dec0_wi[NI:, :] + dec0_bi
    fc_w = jnp.concatenate([w_logits, w_feat], axis=1)     # [2*NW*LG, 6H]
    fc_b = jnp.concatenate([b_logits, b_feat], axis=1)     # [1, 6H]

    pieces, layout = [], {}
    off = 0

    def add(name, mat):
        nonlocal off
        mat = jnp.asarray(mat, f32)
        r, c = mat.shape
        layout[name] = (off, r, c)                          # static python ints
        rpad = (-r) % 8
        pieces.append(jnp.pad(mat, ((0, rpad), (0, SLAB_COLS - c))))
        off += r + rpad

    add("conv_w", conv_w)
    add("conv_b", conv_b)
    add("fc_w", fc_w)
    add("fc_b", fc_b)
    add("up0_wix", up0_wi[:NI, :])                          # inputs part of up0 Wi
    add("up1_wi", fuse_wi(params["gru_up"][1][0]))
    add("up1_bi", fuse_bi(params["gru_up"][1][1]))
    add("up_wh", blockdiag(fuse_wh(params["gru_up"][0][2]), fuse_wh(params["gru_up"][1][2])))
    add("up_bh", jnp.concatenate([fuse_bh(params["gru_up"][0][3]),
                                  fuse_bh(params["gru_up"][1][3])], axis=1))
    add("dec0_wix", dec0_wi[:NI, :])                        # earthquake part of dec0 Wi
    add("dec1_wi", fuse_wi(params["gru_dec"][1][0]))
    add("dec1_bi", fuse_bi(params["gru_dec"][1][1]))
    add("dec_wh", blockdiag(fuse_wh(params["gru_dec"][0][2]), fuse_wh(params["gru_dec"][1][2])))
    add("dec_bh", jnp.concatenate([fuse_bh(params["gru_dec"][0][3]),
                                   fuse_bh(params["gru_dec"][1][3])], axis=1))
    add("mlp_w", jnp.pad(params["mlpW"], ((0, 0), (0, SLAB_COLS - TARGETS_SIZE))))
    add("mlp_b", jnp.pad(params["mlpb"], ((0, 0), (0, SLAB_COLS - TARGETS_SIZE))))

    slab = jnp.concatenate(pieces, axis=0)                  # [R, 128], R multiple of 8
    return slab, layout


# --------------------------------------------------------------------------------
# The single fused kernel
# --------------------------------------------------------------------------------
def _make_kernel(layout):
    H, LG, NI = HIDDEN_SIZE, LOGITS_SIZE, INPUTS_SIZE
    H2, H3 = 2 * H, 3 * H

    def kernel(x_ref, inp_ref, eq_ref, slab_ref, out_ref):
        f32 = jnp.float32
        nb = eq_ref.shape[0]
        seq_len = inp_ref.shape[0] // nb

        def W(name):
            r0, nr, nc = layout[name]
            return slab_ref[r0:r0 + nr, 0:nc]

        # ---- TextCNN (both encoders): ONE dot over the wrapper-built im2col slab,
        #      then ONE aligned max-pool (pad rows / off-window columns are already
        #      pushed to -1e30 by the indicator-column x penalty-row trick).
        conv = jnp.dot(x_ref[...], W("conv_w"), preferred_element_type=f32)   # [nb*NW*L_PAD, NW*2LG]
        pooled = jnp.max(conv.reshape(nb, NW * L_PAD, NW * 2 * LG), axis=1) + W("conv_b")
        # fc of both encoders, pre-composed at pack time with its two consumers:
        #   base0 = logits @ Wi_up0[logits] + bi_up0 ; dfeat = features @ Wi_dec0[feat] + bi_dec0
        # TODO(synk): nn.Dropout(0.6) of the original Encoder is eval-mode identity here.
        fc = jnp.dot(pooled, W("fc_w"), preferred_element_type=f32) + W("fc_b")  # [nb, 6H]
        base0 = fc[:, :H3]
        dfeat = fc[:, H3:]

        # ---- fused-gate GRU cell: gi = x@[Wr|Wz|Wn]+b, gh = h@[Wr|Wr|Wn]+b
        #      ONE sigmoid covers r and the bug-compatible z (z reuses r_layer_h).
        def gate(gi, gh, h):
            rz = jax.nn.sigmoid(gi[:, :H2] + gh[:, :H2])
            n_ = jnp.tanh(gi[:, H2:] + rz[:, :H] * gh[:, H2:])
            z = rz[:, H:]
            return (1.0 - z) * n_ + z * h

        # layer-0 input gates for ALL timesteps hoisted into one dot (off the recurrence).
        gix = jnp.dot(inp_ref[...], W("up0_wix"), preferred_element_type=f32)   # [L*nb, 3H]
        wh_up, bh_up = W("up_wh"), W("up_bh")
        wi1, bi1 = W("up1_wi"), W("up1_bi")

        h0 = jnp.zeros((nb, H), f32)
        h1 = jnp.zeros((nb, H), f32)
        # fully unrolled static time loop: 2 dependent MXU dots per step
        for i in range(seq_len):
            gh = jnp.dot(jnp.concatenate([h0, h1], axis=1), wh_up,
                         preferred_element_type=f32) + bh_up                    # [nb, 6H] = gh0|gh1
            h0 = gate(gix[i * nb:(i + 1) * nb, :] + base0, gh[:, :H3], h0)
            gi1 = jnp.dot(h0, wi1, preferred_element_type=f32) + bi1
            h1 = gate(gi1, gh[:, H3:], h1)

        # ---- decoder GRU stack on cat(earthquake, features), seeded with loop hiddens
        # TODO(synk): original `self.decoder(...)` call omits `hiddens_down` (TypeError in
        # PyTorch); the evident intent (decoder stack seeded with hiddens_up) is implemented.
        ghd = jnp.dot(jnp.concatenate([h0, h1], axis=1), W("dec_wh"),
                      preferred_element_type=f32) + W("dec_bh")                 # [nb, 6H]
        gd0 = jnp.dot(eq_ref[...], W("dec0_wix"), preferred_element_type=f32) + dfeat
        y = gate(gd0, ghd[:, :H3], h0)
        gd1 = jnp.dot(y, W("dec1_wi"), preferred_element_type=f32) + W("dec1_bi")
        y = gate(gd1, ghd[:, H3:], h1)

        # mlp pre-padded to 128 lanes -> full (8,128) unmasked, lane-dense store.
        out_ref[...] = jnp.dot(y, W("mlp_w"), preferred_element_type=f32) + W("mlp_b")

    return kernel


# --------------------------------------------------------------------------------
# Wrapper-side im2col (runs in XLA, not in the kernel): builds the conv window slab
# with shared data columns and per-window pad/off-window indicator columns.
# --------------------------------------------------------------------------------
def _build_im2col(mt):   # mt: [NB, MATRIX_LEN, C_in] channels-last, batch already padded
    nb = mt.shape[0]
    C = MATRIX_DIM
    per_win = []
    for ki, k in enumerate(KERNEL_WINS):
        l_out = MATRIX_LEN - k + 1
        win = jnp.concatenate([mt[:, j:j + l_out, :] for j in range(k)], axis=2)   # [nb, l_out, k*C]
        win = jnp.pad(win, ((0, 0), (0, L_PAD - l_out), (0, DATA_COLS - k * C)))   # [nb, L_PAD, 40]
        is_pad = (jnp.arange(L_PAD) >= l_out).astype(jnp.float32)                  # [L_PAD]
        ind = jnp.stack([is_pad if kj == ki else jnp.ones((L_PAD,), jnp.float32)
                         for kj in range(NW)], axis=1)                             # [L_PAD, NW]
        ind = jnp.broadcast_to(ind[None], (nb, L_PAD, NW))
        per_win.append(jnp.concatenate([win, ind], axis=2))                        # [nb, L_PAD, 43]
    x = jnp.stack(per_win, axis=1)                                                 # [nb, NW, L_PAD, 43]
    return x.reshape(nb * NW * L_PAD, X_COLS)


# --------------------------------------------------------------------------------
# Full forward: one pallas_call (everything VMEM-resident), jitted glue around it.
# --------------------------------------------------------------------------------
def build_forward(layout):
    kernel = _make_kernel(layout)
    vmem = pl.BlockSpec(memory_space=pltpu.MemorySpace.VMEM)

    @jax.jit
    def forward(inputs, matrix, earthquake, slab):
        """
        inputs:     [L, N, INPUTS_SIZE]
        matrix:     [N, MATRIX_DIM, MATRIX_LEN]   (PyTorch Conv1d NCW layout)
        earthquake: [1, N, INPUTS_SIZE]
        slab:       [R, 128] packed weights (pack_params)
        returns:    [1, N, TARGETS_SIZE]
        """
        l, n, _ = inputs.shape
        nb = NB_PAD
        mt = jnp.transpose(matrix, (0, 2, 1))                          # [N, L_m, C_in]
        mt = jnp.pad(mt, ((0, nb - n), (0, 0), (0, 0)))                # pad batch -> 8 sublanes
        x = _build_im2col(mt)                                          # [nb*NW*L_PAD, 43]
        inp = jnp.pad(inputs, ((0, 0), (0, nb - n), (0, 0))).reshape(l * nb, INPUTS_SIZE)
        eq = jnp.pad(earthquake[0], ((0, nb - n), (0, 0)))             # [nb, NI]

        out = pl.pallas_call(
            kernel,
            out_shape=jax.ShapeDtypeStruct((nb, SLAB_COLS), jnp.float32),
            in_specs=[vmem, vmem, vmem, vmem],
            out_specs=vmem,
        )(x, inp, eq, slab)
        return out[:n, :TARGETS_SIZE][None]                            # [1, N, TARGETS_SIZE]

    return forward


# --------------------------------------------------------------------------------
# Pure-JAX reference (same params / same semantics) for correctness checking
# --------------------------------------------------------------------------------
def ref_forward(inputs, matrix, earthquake, params):
    matrix_t = jnp.transpose(matrix, (0, 2, 1))

    def cnn(p):
        pooled = []
        for (wk, bk) in p["convs"]:
            k = wk.shape[0]
            l_out = matrix_t.shape[1] - k + 1
            acc = sum(jnp.einsum("nlc,ch->nlh", matrix_t[:, j:j + l_out, :], wk[j])
                      for j in range(k)) + bk
            pooled.append(jnp.max(acc, axis=1))
        feat = jnp.concatenate(pooled, axis=-1)
        return feat @ p["fcW"] + p["fcb"]

    def cell(x, h, p):
        wi, bi, wh, bh = p
        gr_i = x @ wi[0] + bi[0]
        gz_i = x @ wi[1] + bi[1]
        gn_i = x @ wi[2] + bi[2]
        gr_h = h @ wh[0] + bh[0]
        gn_h = h @ wh[1] + bh[1]
        r = jax.nn.sigmoid(gr_i + gr_h)
        z = jax.nn.sigmoid(gz_i + gr_h)
        n_ = jnp.tanh(gn_i + r * gn_h)
        return (1.0 - z) * n_ + z * h

    logits = cnn(params["enc"])
    features = cnn(params["dec_enc"])
    l, n, _ = inputs.shape
    hiddens = [jnp.zeros((n, HIDDEN_SIZE), jnp.float32) for _ in range(NUM_LAYERS)]
    for i in range(l):
        y = jnp.concatenate([inputs[i], logits], axis=-1)
        for li in range(NUM_LAYERS):
            y = cell(y, hiddens[li], params["gru_up"][li])
            hiddens[li] = y
    y = jnp.concatenate([earthquake[0], features], axis=-1)
    for li in range(NUM_LAYERS):
        y = cell(y, hiddens[li], params["gru_dec"][li])
    return (y @ params["mlpW"] + params["mlpb"])[None]


# --------------------------------------------------------------------------------
if __name__ == "__main__":
    key = jax.random.PRNGKey(0)
    k_param, k_in, k_mat, k_eq = jax.random.split(key, 4)

    params = init_params(k_param)
    inputs = jax.random.normal(k_in, (SEQ_LEN, BATCH, INPUTS_SIZE), jnp.float32)
    matrix = jax.random.normal(k_mat, (BATCH, MATRIX_DIM, MATRIX_LEN), jnp.float32)
    earthquake = jax.random.normal(k_eq, (1, BATCH, INPUTS_SIZE), jnp.float32)

    slab, layout = pack_params(params)        # one-time weight packing (outside jit)
    forward = build_forward(layout)

    out = jax.block_until_ready(forward(inputs, matrix, earthquake, slab))

    ref = ref_forward(inputs, matrix, earthquake, params)
    assert out.shape == (1, BATCH, TARGETS_SIZE), out.shape
    assert bool(jnp.allclose(out, ref, rtol=1e-4, atol=1e-4)), "mismatch vs JAX reference"

    print("KERNEL_OK")
</pallas_src>

<mosaic_0001>
module attributes {stable_mosaic.version = 11 : i64} {
  func.func @kernel(%arg0: memref<384x43xf32, #tpu.memory_space<vmem>>, %arg1: memref<32x16xf32, #tpu.memory_space<vmem>>, %arg2: memref<8x16xf32, #tpu.memory_space<vmem>>, %arg3: memref<216x128xf32, #tpu.memory_space<vmem>>, %arg4: memref<8x128xf32, #tpu.memory_space<vmem>>) attributes {dimension_semantics = [], scalar_prefetch = 0 : i64, scratch_operands = 0 : i64, tpu.core_type = #tpu.core_type<tc>} {
    %c0 = arith.constant 0 : index
    %c0_0 = arith.constant 0 : index
    %0 = vector.load %arg0[%c0, %c0_0] : memref<384x43xf32, #tpu.memory_space<vmem>>, vector<384x43xf32>
    %c0_1 = arith.constant 0 : index
    %c0_2 = arith.constant 0 : index
    %1 = vector.load %arg3[%c0_1, %c0_2] : memref<216x128xf32, #tpu.memory_space<vmem>>, vector<43x24xf32>
    %cst = arith.constant dense<0.000000e+00> : vector<384x24xf32>
    %2 = tpu.matmul %0, %1, %cst {dimension_numbers = #tpu.dot_dimension_numbers<[1], [0], [0], [1], [0, 0, 1, 1], [], []>} : vector<384x43xf32>, vector<43x24xf32>, vector<384x24xf32> -> vector<384x24xf32>
    %3 = vector.shape_cast %2 : vector<384x24xf32> to vector<8x48x24xf32>
    %cst_3 = arith.constant dense<0xFF800000> : vector<8x24xf32>
    %4 = vector.multi_reduction <maximumf>, %3, %cst_3 [1] : vector<8x48x24xf32> to vector<8x24xf32>
    %c48 = arith.constant 48 : index
    %c0_4 = arith.constant 0 : index
    %5 = vector.load %arg3[%c48, %c0_4] : memref<216x128xf32, #tpu.memory_space<vmem>>, vector<1x24xf32>
    %6 = vector.broadcast %5 : vector<1x24xf32> to vector<8x24xf32>
    %7 = arith.addf %4, %6 : vector<8x24xf32>
    %c56 = arith.constant 56 : index
    %c0_5 = arith.constant 0 : index
    %8 = vector.load %arg3[%c56, %c0_5] : memref<216x128xf32, #tpu.memory_space<vmem>>, vector<24x48xf32>
    %cst_6 = arith.constant dense<0.000000e+00> : vector<8x48xf32>
    %9 = tpu.matmul %7, %8, %cst_6 {dimension_numbers = #tpu.dot_dimension_numbers<[1], [0], [0], [1], [0, 0, 1, 1], [], []>} : vector<8x24xf32>, vector<24x48xf32>, vector<8x48xf32> -> vector<8x48xf32>
    %c80 = arith.constant 80 : index
    %c0_7 = arith.constant 0 : index
    %10 = vector.load %arg3[%c80, %c0_7] : memref<216x128xf32, #tpu.memory_space<vmem>>, vector<1x48xf32>
    %11 = vector.broadcast %10 : vector<1x48xf32> to vector<8x48xf32>
    %12 = arith.addf %9, %11 : vector<8x48xf32>
    %13 = vector.extract_strided_slice %12 {offsets = [0, 0], sizes = [8, 24], strides = [1, 1]} : vector<8x48xf32> to vector<8x24xf32>
    %14 = vector.extract_strided_slice %12 {offsets = [0, 24], sizes = [8, 24], strides = [1, 1]} : vector<8x48xf32> to vector<8x24xf32>
    %c0_8 = arith.constant 0 : index
    %c0_9 = arith.constant 0 : index
    %15 = vector.load %arg1[%c0_8, %c0_9] : memref<32x16xf32, #tpu.memory_space<vmem>>, vector<32x16xf32>
    %c88 = arith.constant 88 : index
    %c0_10 = arith.constant 0 : index
    %16 = vector.load %arg3[%c88, %c0_10] : memref<216x128xf32, #tpu.memory_space<vmem>>, vector<16x24xf32>
    %cst_11 = arith.constant dense<0.000000e+00> : vector<32x24xf32>
    %17 = tpu.matmul %15, %16, %cst_11 {dimension_numbers = #tpu.dot_dimension_numbers<[1], [0], [0], [1], [0, 0, 1, 1], [], []>} : vector<32x16xf32>, vector<16x24xf32>, vector<32x24xf32> -> vector<32x24xf32>
    %c120 = arith.constant 120 : index
    %c0_12 = arith.constant 0 : index
    %18 = vector.load %arg3[%c120, %c0_12] : memref<216x128xf32, #tpu.memory_space<vmem>>, vector<16x48xf32>
    %c136 = arith.constant 136 : index
    %c0_13 = arith.constant 0 : index
    %19 = vector.load %arg3[%c136, %c0_13] : memref<216x128xf32, #tpu.memory_space<vmem>>, vector<1x48xf32>
    %c104 = arith.constant 104 : index
    %c0_14 = arith.constant 0 : index
    %20 = vector.load %arg3[%c104, %c0_14] : memref<216x128xf32, #tpu.memory_space<vmem>>, vector<8x24xf32>
    %c112 = arith.constant 112 : index
    %c0_15 = arith.constant 0 : index
    %21 = vector.load %arg3[%c112, %c0_15] : memref<216x128xf32, #tpu.memory_space<vmem>>, vector<1x24xf32>
    %cst_16 = arith.constant 0.000000e+00 : f32
    %22 = vector.broadcast %cst_16 : f32 to vector<8x8xf32>
    %cst_17 = arith.constant 0.000000e+00 : f32
    %23 = vector.broadcast %cst_17 : f32 to vector<8x8xf32>
    %24 = tpu.concatenate %22, %23 in 1 : vector<8x8xf32>, vector<8x8xf32> -> vector<8x16xf32>
    %cst_18 = arith.constant dense<0.000000e+00> : vector<8x48xf32>
    %25 = tpu.matmul %24, %18, %cst_18 {dimension_numbers = #tpu.dot_dimension_numbers<[1], [0], [0], [1], [0, 0, 1, 1], [], []>} : vector<8x16xf32>, vector<16x48xf32>, vector<8x48xf32> -> vector<8x48xf32>
    %26 = vector.broadcast %19 : vector<1x48xf32> to vector<8x48xf32>
    %27 = arith.addf %25, %26 : vector<8x48xf32>
    %28 = vector.extract_strided_slice %17 {offsets = [0, 0], sizes = [8, 24], strides = [1, 1]} : vector<32x24xf32> to vector<8x24xf32>
    %29 = arith.addf %28, %13 : vector<8x24xf32>
    %30 = vector.extract_strided_slice %27 {offsets = [0, 0], sizes = [8, 24], strides = [1, 1]} : vector<8x48xf32> to vector<8x24xf32>
    %31 = vector.extract_strided_slice %29 {offsets = [0, 0], sizes = [8, 16], strides = [1, 1]} : vector<8x24xf32> to vector<8x16xf32>
    %32 = vector.extract_strided_slice %30 {offsets = [0, 0], sizes = [8, 16], strides = [1, 1]} : vector<8x24xf32> to vector<8x16xf32>
    %33 = arith.addf %31, %32 : vector<8x16xf32>
    %34 = arith.negf %33 : vector<8x16xf32>
    %35 = math.exp %34 : vector<8x16xf32>
    %cst_19 = arith.constant 1.000000e+00 : f32
    %36 = vector.broadcast %cst_19 : f32 to vector<8x16xf32>
    %37 = arith.addf %36, %35 : vector<8x16xf32>
    %38 = arith.divf %36, %37 : vector<8x16xf32>
    %39 = vector.extract_strided_slice %29 {offsets = [0, 16], sizes = [8, 8], strides = [1, 1]} : vector<8x24xf32> to vector<8x8xf32>
    %40 = vector.extract_strided_slice %38 {offsets = [0, 0], sizes = [8, 8], strides = [1, 1]} : vector<8x16xf32> to vector<8x8xf32>
    %41 = vector.extract_strided_slice %30 {offsets = [0, 16], sizes = [8, 8], strides = [1, 1]} : vector<8x24xf32> to vector<8x8xf32>
    %42 = arith.mulf %40, %41 : vector<8x8xf32>
    %43 = arith.addf %39, %42 : vector<8x8xf32>
    %44 = math.tanh %43 : vector<8x8xf32>
    %45 = vector.extract_strided_slice %38 {offsets = [0, 8], sizes = [8, 8], strides = [1, 1]} : vector<8x16xf32> to vector<8x8xf32>
    %cst_20 = arith.constant 1.000000e+00 : f32
    %46 = vector.broadcast %cst_20 : f32 to vector<8x8xf32>
    %47 = arith.subf %46, %45 : vector<8x8xf32>
    %48 = arith.mulf %47, %44 : vector<8x8xf32>
    %49 = arith.mulf %45, %22 : vector<8x8xf32>
    %50 = arith.addf %48, %49 : vector<8x8xf32>
    %cst_21 = arith.constant dense<0.000000e+00> : vector<8x24xf32>
    %51 = tpu.matmul %50, %20, %cst_21 {dimension_numbers = #tpu.dot_dimension_numbers<[1], [0], [0], [1], [0, 0, 1, 1], [], []>} : vector<8x8xf32>, vector<8x24xf32>, vector<8x24xf32> -> vector<8x24xf32>
    %52 = vector.broadcast %21 : vector<1x24xf32> to vector<8x24xf32>
    %53 = arith.addf %51, %52 : vector<8x24xf32>
    %54 = vector.extract_strided_slice %27 {offsets = [0, 24], sizes = [8, 24], strides = [1, 1]} : vector<8x48xf32> to vector<8x24xf32>
    %55 = vector.extract_strided_slice %53 {offsets = [0, 0], sizes = [8, 16], strides = [1, 1]} : vector<8x24xf32> to vector<8x16xf32>
    %56 = vector.extract_strided_slice %54 {offsets = [0, 0], sizes = [8, 16], strides = [1, 1]} : vector<8x24xf32> to vector<8x16xf32>
    %57 = arith.addf %55, %56 : vector<8x16xf32>
    %58 = arith.negf %57 : vector<8x16xf32>
    %59 = math.exp %58 : vector<8x16xf32>
    %cst_22 = arith.constant 1.000000e+00 : f32
    %60 = vector.broadcast %cst_22 : f32 to vector<8x16xf32>
    %61 = arith.addf %60, %59 : vector<8x16xf32>
    %62 = arith.divf %60, %61 : vector<8x16xf32>
    %63 = vector.extract_strided_slice %53 {offsets = [0, 16], sizes = [8, 8], strides = [1, 1]} : vector<8x24xf32> to vector<8x8xf32>
    %64 = vector.extract_strided_slice %62 {offsets = [0, 0], sizes = [8, 8], strides = [1, 1]} : vector<8x16xf32> to vector<8x8xf32>
    %65 = vector.extract_strided_slice %54 {offsets = [0, 16], sizes = [8, 8], strides = [1, 1]} : vector<8x24xf32> to vector<8x8xf32>
    %66 = arith.mulf %64, %65 : vector<8x8xf32>
    %67 = arith.addf %63, %66 : vector<8x8xf32>
    %68 = math.tanh %67 : vector<8x8xf32>
    %69 = vector.extract_strided_slice %62 {offsets = [0, 8], sizes = [8, 8], strides = [1, 1]} : vector<8x16xf32> to vector<8x8xf32>
    %cst_23 = arith.constant 1.000000e+00 : f32
    %70 = vector.broadcast %cst_23 : f32 to vector<8x8xf32>
    %71 = arith.subf %70, %69 : vector<8x8xf32>
    %72 = arith.mulf %71, %68 : vector<8x8xf32>
    %73 = arith.mulf %69, %23 : vector<8x8xf32>
    %74 = arith.addf %72, %73 : vector<8x8xf32>
    %75 = tpu.concatenate %50, %74 in 1 : vector<8x8xf32>, vector<8x8xf32> -> vector<8x16xf32>
    %cst_24 = arith.constant dense<0.000000e+00> : vector<8x48xf32>
    %76 = tpu.matmul %75, %18, %cst_24 {dimension_numbers = #tpu.dot_dimension_numbers<[1], [0], [0], [1], [0, 0, 1, 1], [], []>} : vector<8x16xf32>, vector<16x48xf32>, vector<8x48xf32> -> vector<8x48xf32>
    %77 = vector.broadcast %19 : vector<1x48xf32> to vector<8x48xf32>
    %78 = arith.addf %76, %77 : vector<8x48xf32>
    %79 = vector.extract_strided_slice %17 {offsets = [8, 0], sizes = [8, 24], strides = [1, 1]} : vector<32x24xf32> to vector<8x24xf32>
    %80 = arith.addf %79, %13 : vector<8x24xf32>
    %81 = vector.extract_strided_slice %78 {offsets = [0, 0], sizes = [8, 24], strides = [1, 1]} : vector<8x48xf32> to vector<8x24xf32>
    %82 = vector.extract_strided_slice %80 {offsets = [0, 0], sizes = [8, 16], strides = [1, 1]} : vector<8x24xf32> to vector<8x16xf32>
    %83 = vector.extract_strided_slice %81 {offsets = [0, 0], sizes = [8, 16], strides = [1, 1]} : vector<8x24xf32> to vector<8x16xf32>
    %84 = arith.addf %82, %83 : vector<8x16xf32>
    %85 = arith.negf %84 : vector<8x16xf32>
    %86 = math.exp %85 : vector<8x16xf32>
    %cst_25 = arith.constant 1.000000e+00 : f32
    %87 = vector.broadcast %cst_25 : f32 to vector<8x16xf32>
    %88 = arith.addf %87, %86 : vector<8x16xf32>
    %89 = arith.divf %87, %88 : vector<8x16xf32>
    %90 = vector.extract_strided_slice %80 {offsets = [0, 16], sizes = [8, 8], strides = [1, 1]} : vector<8x24xf32> to vector<8x8xf32>
    %91 = vector.extract_strided_slice %89 {offsets = [0, 0], sizes = [8, 8], strides = [1, 1]} : vector<8x16xf32> to vector<8x8xf32>
    %92 = vector.extract_strided_slice %81 {offsets = [0, 16], sizes = [8, 8], strides = [1, 1]} : vector<8x24xf32> to vector<8x8xf32>
    %93 = arith.mulf %91, %92 : vector<8x8xf32>
    %94 = arith.addf %90, %93 : vector<8x8xf32>
    %95 = math.tanh %94 : vector<8x8xf32>
    %96 = vector.extract_strided_slice %89 {offsets = [0, 8], sizes = [8, 8], strides = [1, 1]} : vector<8x16xf32> to vector<8x8xf32>
    %cst_26 = arith.constant 1.000000e+00 : f32
    %97 = vector.broadcast %cst_26 : f32 to vector<8x8xf32>
    %98 = arith.subf %97, %96 : vector<8x8xf32>
    %99 = arith.mulf %98, %95 : vector<8x8xf32>
    %100 = arith.mulf %96, %50 : vector<8x8xf32>
    %101 = arith.addf %99, %100 : vector<8x8xf32>
    %cst_27 = arith.constant dense<0.000000e+00> : vector<8x24xf32>
    %102 = tpu.matmul %101, %20, %cst_27 {dimension_numbers = #tpu.dot_dimension_numbers<[1], [0], [0], [1], [0, 0, 1, 1], [], []>} : vector<8x8xf32>, vector<8x24xf32>, vector<8x24xf32> -> vector<8x24xf32>
    %103 = vector.broadcast %21 : vector<1x24xf32> to vector<8x24xf32>
    %104 = arith.addf %102, %103 : vector<8x24xf32>
    %105 = vector.extract_strided_slice %78 {offsets = [0, 24], sizes = [8, 24], strides = [1, 1]} : vector<8x48xf32> to vector<8x24xf32>
    %106 = vector.extract_strided_slice %104 {offsets = [0, 0], sizes = [8, 16], strides = [1, 1]} : vector<8x24xf32> to vector<8x16xf32>
    %107 = vector.extract_strided_slice %105 {offsets = [0, 0], sizes = [8, 16], strides = [1, 1]} : vector<8x24xf32> to vector<8x16xf32>
    %108 = arith.addf %106, %107 : vector<8x16xf32>
    %109 = arith.negf %108 : vector<8x16xf32>
    %110 = math.exp %109 : vector<8x16xf32>
    %cst_28 = arith.constant 1.000000e+00 : f32
    %111 = vector.broadcast %cst_28 : f32 to vector<8x16xf32>
    %112 = arith.addf %111, %110 : vector<8x16xf32>
    %113 = arith.divf %111, %112 : vector<8x16xf32>
    %114 = vector.extract_strided_slice %104 {offsets = [0, 16], sizes = [8, 8], strides = [1, 1]} : vector<8x24xf32> to vector<8x8xf32>
    %115 = vector.extract_strided_slice %113 {offsets = [0, 0], sizes = [8, 8], strides = [1, 1]} : vector<8x16xf32> to vector<8x8xf32>
    %116 = vector.extract_strided_slice %105 {offsets = [0, 16], sizes = [8, 8], strides = [1, 1]} : vector<8x24xf32> to vector<8x8xf32>
    %117 = arith.mulf %115, %116 : vector<8x8xf32>
    %118 = arith.addf %114, %117 : vector<8x8xf32>
    %119 = math.tanh %118 : vector<8x8xf32>
    %120 = vector.extract_strided_slice %113 {offsets = [0, 8], sizes = [8, 8], strides = [1, 1]} : vector<8x16xf32> to vector<8x8xf32>
    %cst_29 = arith.constant 1.000000e+00 : f32
    %121 = vector.broadcast %cst_29 : f32 to vector<8x8xf32>
    %122 = arith.subf %121, %120 : vector<8x8xf32>
    %123 = arith.mulf %122, %119 : vector<8x8xf32>
    %124 = arith.mulf %120, %74 : vector<8x8xf32>
    %125 = arith.addf %123, %124 : vector<8x8xf32>
    %126 = tpu.concatenate %101, %125 in 1 : vector<8x8xf32>, vector<8x8xf32> -> vector<8x16xf32>
    %cst_30 = arith.constant dense<0.000000e+00> : vector<8x48xf32>
    %127 = tpu.matmul %126, %18, %cst_30 {dimension_numbers = #tpu.dot_dimension_numbers<[1], [0], [0], [1], [0, 0, 1, 1], [], []>} : vector<8x16xf32>, vector<16x48xf32>, vector<8x48xf32> -> vector<8x48xf32>
    %128 = vector.broadcast %19 : vector<1x48xf32> to vector<8x48xf32>
    %129 = arith.addf %127, %128 : vector<8x48xf32>
    %130 = vector.extract_strided_slice %17 {offsets = [16, 0], sizes = [8, 24], strides = [1, 1]} : vector<32x24xf32> to vector<8x24xf32>
    %131 = arith.addf %130, %13 : vector<8x24xf32>
    %132 = vector.extract_strided_slice %129 {offsets = [0, 0], sizes = [8, 24], strides = [1, 1]} : vector<8x48xf32> to vector<8x24xf32>
    %133 = vector.extract_strided_slice %131 {offsets = [0, 0], sizes = [8, 16], strides = [1, 1]} : vector<8x24xf32> to vector<8x16xf32>
    %134 = vector.extract_strided_slice %132 {offsets = [0, 0], sizes = [8, 16], strides = [1, 1]} : vector<8x24xf32> to vector<8x16xf32>
    %135 = arith.addf %133, %134 : vector<8x16xf32>
    %136 = arith.negf %135 : vector<8x16xf32>
    %137 = math.exp %136 : vector<8x16xf32>
    %cst_31 = arith.constant 1.000000e+00 : f32
    %138 = vector.broadcast %cst_31 : f32 to vector<8x16xf32>
    %139 = arith.addf %138, %137 : vector<8x16xf32>
    %140 = arith.divf %138, %139 : vector<8x16xf32>
    %141 = vector.extract_strided_slice %131 {offsets = [0, 16], sizes = [8, 8], strides = [1, 1]} : vector<8x24xf32> to vector<8x8xf32>
    %142 = vector.extract_strided_slice %140 {offsets = [0, 0], sizes = [8, 8], strides = [1, 1]} : vector<8x16xf32> to vector<8x8xf32>
    %143 = vector.extract_strided_slice %132 {offsets = [0, 16], sizes = [8, 8], strides = [1, 1]} : vector<8x24xf32> to vector<8x8xf32>
    %144 = arith.mulf %142, %143 : vector<8x8xf32>
    %145 = arith.addf %141, %144 : vector<8x8xf32>
    %146 = math.tanh %145 : vector<8x8xf32>
    %147 = vector.extract_strided_slice %140 {offsets = [0, 8], sizes = [8, 8], strides = [1, 1]} : vector<8x16xf32> to vector<8x8xf32>
    %cst_32 = arith.constant 1.000000e+00 : f32
    %148 = vector.broadcast %cst_32 : f32 to vector<8x8xf32>
    %149 = arith.subf %148, %147 : vector<8x8xf32>
    %150 = arith.mulf %149, %146 : vector<8x8xf32>
    %151 = arith.mulf %147, %101 : vector<8x8xf32>
    %152 = arith.addf %150, %151 : vector<8x8xf32>
    %cst_33 = arith.constant dense<0.000000e+00> : vector<8x24xf32>
    %153 = tpu.matmul %152, %20, %cst_33 {dimension_numbers = #tpu.dot_dimension_numbers<[1], [0], [0], [1], [0, 0, 1, 1], [], []>} : vector<8x8xf32>, vector<8x24xf32>, vector<8x24xf32> -> vector<8x24xf32>
    %154 = vector.broadcast %21 : vector<1x24xf32> to vector<8x24xf32>
    %155 = arith.addf %153, %154 : vector<8x24xf32>
    %156 = vector.extract_strided_slice %129 {offsets = [0, 24], sizes = [8, 24], strides = [1, 1]} : vector<8x48xf32> to vector<8x24xf32>
    %157 = vector.extract_strided_slice %155 {offsets = [0, 0], sizes = [8, 16], strides = [1, 1]} : vector<8x24xf32> to vector<8x16xf32>
    %158 = vector.extract_strided_slice %156 {offsets = [0, 0], sizes = [8, 16], strides = [1, 1]} : vector<8x24xf32> to vector<8x16xf32>
    %159 = arith.addf %157, %158 : vector<8x16xf32>
    %160 = arith.negf %159 : vector<8x16xf32>
    %161 = math.exp %160 : vector<8x16xf32>
    %cst_34 = arith.constant 1.000000e+00 : f32
    %162 = vector.broadcast %cst_34 : f32 to vector<8x16xf32>
    %163 = arith.addf %162, %161 : vector<8x16xf32>
    %164 = arith.divf %162, %163 : vector<8x16xf32>
    %165 = vector.extract_strided_slice %155 {offsets = [0, 16], sizes = [8, 8], strides = [1, 1]} : vector<8x24xf32> to vector<8x8xf32>
    %166 = vector.extract_strided_slice %164 {offsets = [0, 0], sizes = [8, 8], strides = [1, 1]} : vector<8x16xf32> to vector<8x8xf32>
    %167 = vector.extract_strided_slice %156 {offsets = [0, 16], sizes = [8, 8], strides = [1, 1]} : vector<8x24xf32> to vector<8x8xf32>
    %168 = arith.mulf %166, %167 : vector<8x8xf32>
    %169 = arith.addf %165, %168 : vector<8x8xf32>
    %170 = math.tanh %169 : vector<8x8xf32>
    %171 = vector.extract_strided_slice %164 {offsets = [0, 8], sizes = [8, 8], strides = [1, 1]} : vector<8x16xf32> to vector<8x8xf32>
    %cst_35 = arith.constant 1.000000e+00 : f32
    %172 = vector.broadcast %cst_35 : f32 to vector<8x8xf32>
    %173 = arith.subf %172, %171 : vector<8x8xf32>
    %174 = arith.mulf %173, %170 : vector<8x8xf32>
    %175 = arith.mulf %171, %125 : vector<8x8xf32>
    %176 = arith.addf %174, %175 : vector<8x8xf32>
    %177 = tpu.concatenate %152, %176 in 1 : vector<8x8xf32>, vector<8x8xf32> -> vector<8x16xf32>
    %cst_36 = arith.constant dense<0.000000e+00> : vector<8x48xf32>
    %178 = tpu.matmul %177, %18, %cst_36 {dimension_numbers = #tpu.dot_dimension_numbers<[1], [0], [0], [1], [0, 0, 1, 1], [], []>} : vector<8x16xf32>, vector<16x48xf32>, vector<8x48xf32> -> vector<8x48xf32>
    %179 = vector.broadcast %19 : vector<1x48xf32> to vector<8x48xf32>
    %180 = arith.addf %178, %179 : vector<8x48xf32>
    %181 = vector.extract_strided_slice %17 {offsets = [24, 0], sizes = [8, 24], strides = [1, 1]} : vector<32x24xf32> to vector<8x24xf32>
    %182 = arith.addf %181, %13 : vector<8x24xf32>
    %183 = vector.extract_strided_slice %180 {offsets = [0, 0], sizes = [8, 24], strides = [1, 1]} : vector<8x48xf32> to vector<8x24xf32>
    %184 = vector.extract_strided_slice %182 {offsets = [0, 0], sizes = [8, 16], strides = [1, 1]} : vector<8x24xf32> to vector<8x16xf32>
    %185 = vector.extract_strided_slice %183 {offsets = [0, 0], sizes = [8, 16], strides = [1, 1]} : vector<8x24xf32> to vector<8x16xf32>
    %186 = arith.addf %184, %185 : vector<8x16xf32>
    %187 = arith.negf %186 : vector<8x16xf32>
    %188 = math.exp %187 : vector<8x16xf32>
    %cst_37 = arith.constant 1.000000e+00 : f32
    %189 = vector.broadcast %cst_37 : f32 to vector<8x16xf32>
    %190 = arith.addf %189, %188 : vector<8x16xf32>
    %191 = arith.divf %189, %190 : vector<8x16xf32>
    %192 = vector.extract_strided_slice %182 {offsets = [0, 16], sizes = [8, 8], strides = [1, 1]} : vector<8x24xf32> to vector<8x8xf32>
    %193 = vector.extract_strided_slice %191 {offsets = [0, 0], sizes = [8, 8], strides = [1, 1]} : vector<8x16xf32> to vector<8x8xf32>
    %194 = vector.extract_strided_slice %183 {offsets = [0, 16], sizes = [8, 8], strides = [1, 1]} : vector<8x24xf32> to vector<8x8xf32>
    %195 = arith.mulf %193, %194 : vector<8x8xf32>
    %196 = arith.addf %192, %195 : vector<8x8xf32>
    %197 = math.tanh %196 : vector<8x8xf32>
    %198 = vector.extract_strided_slice %191 {offsets = [0, 8], sizes = [8, 8], strides = [1, 1]} : vector<8x16xf32> to vector<8x8xf32>
    %cst_38 = arith.constant 1.000000e+00 : f32
    %199 = vector.broadcast %cst_38 : f32 to vector<8x8xf32>
    %200 = arith.subf %199, %198 : vector<8x8xf32>
    %201 = arith.mulf %200, %197 : vector<8x8xf32>
    %202 = arith.mulf %198, %152 : vector<8x8xf32>
    %203 = arith.addf %201, %202 : vector<8x8xf32>
    %cst_39 = arith.constant dense<0.000000e+00> : vector<8x24xf32>
    %204 = tpu.matmul %203, %20, %cst_39 {dimension_numbers = #tpu.dot_dimension_numbers<[1], [0], [0], [1], [0, 0, 1, 1], [], []>} : vector<8x8xf32>, vector<8x24xf32>, vector<8x24xf32> -> vector<8x24xf32>
    %205 = vector.broadcast %21 : vector<1x24xf32> to vector<8x24xf32>
    %206 = arith.addf %204, %205 : vector<8x24xf32>
    %207 = vector.extract_strided_slice %180 {offsets = [0, 24], sizes = [8, 24], strides = [1, 1]} : vector<8x48xf32> to vector<8x24xf32>
    %208 = vector.extract_strided_slice %206 {offsets = [0, 0], sizes = [8, 16], strides = [1, 1]} : vector<8x24xf32> to vector<8x16xf32>
    %209 = vector.extract_strided_slice %207 {offsets = [0, 0], sizes = [8, 16], strides = [1, 1]} : vector<8x24xf32> to vector<8x16xf32>
    %210 = arith.addf %208, %209 : vector<8x16xf32>
    %211 = arith.negf %210 : vector<8x16xf32>
    %212 = math.exp %211 : vector<8x16xf32>
    %cst_40 = arith.constant 1.000000e+00 : f32
    %213 = vector.broadcast %cst_40 : f32 to vector<8x16xf32>
    %214 = arith.addf %213, %212 : vector<8x16xf32>
    %215 = arith.divf %213, %214 : vector<8x16xf32>
    %216 = vector.extract_strided_slice %206 {offsets = [0, 16], sizes = [8, 8], strides = [1, 1]} : vector<8x24xf32> to vector<8x8xf32>
    %217 = vector.extract_strided_slice %215 {offsets = [0, 0], sizes = [8, 8], strides = [1, 1]} : vector<8x16xf32> to vector<8x8xf32>
    %218 = vector.extract_strided_slice %207 {offsets = [0, 16], sizes = [8, 8], strides = [1, 1]} : vector<8x24xf32> to vector<8x8xf32>
    %219 = arith.mulf %217, %218 : vector<8x8xf32>
    %220 = arith.addf %216, %219 : vector<8x8xf32>
    %221 = math.tanh %220 : vector<8x8xf32>
    %222 = vector.extract_strided_slice %215 {offsets = [0, 8], sizes = [8, 8], strides = [1, 1]} : vector<8x16xf32> to vector<8x8xf32>
    %cst_41 = arith.constant 1.000000e+00 : f32
    %223 = vector.broadcast %cst_41 : f32 to vector<8x8xf32>
    %224 = arith.subf %223, %222 : vector<8x8xf32>
    %225 = arith.mulf %224, %221 : vector<8x8xf32>
    %226 = arith.mulf %222, %176 : vector<8x8xf32>
    %227 = arith.addf %225, %226 : vector<8x8xf32>
    %228 = tpu.concatenate %203, %227 in 1 : vector<8x8xf32>, vector<8x8xf32> -> vector<8x16xf32>
    %c176 = arith.constant 176 : index
    %c0_42 = arith.constant 0 : index
    %229 = vector.load %arg3[%c176, %c0_42] : memref<216x128xf32, #tpu.memory_space<vmem>>, vector<16x48xf32>
    %cst_43 = arith.constant dense<0.000000e+00> : vector<8x48xf32>
    %230 = tpu.matmul %228, %229, %cst_43 {dimension_numbers = #tpu.dot_dimension_numbers<[1], [0], [0], [1], [0, 0, 1, 1], [], []>} : vector<8x16xf32>, vector<16x48xf32>, vector<8x48xf32> -> vector<8x48xf32>
    %c192 = arith.constant 192 : index
    %c0_44 = arith.constant 0 : index
    %231 = vector.load %arg3[%c192, %c0_44] : memref<216x128xf32, #tpu.memory_space<vmem>>, vector<1x48xf32>
    %232 = vector.broadcast %231 : vector<1x48xf32> to vector<8x48xf32>
    %233 = arith.addf %230, %232 : vector<8x48xf32>
    %c0_45 = arith.constant 0 : index
    %c0_46 = arith.constant 0 : index
    %234 = vector.load %arg2[%c0_45, %c0_46] : memref<8x16xf32, #tpu.memory_space<vmem>>, vector<8x16xf32>
    %c144 = arith.constant 144 : index
    %c0_47 = arith.constant 0 : index
    %235 = vector.load %arg3[%c144, %c0_47] : memref<216x128xf32, #tpu.memory_space<vmem>>, vector<16x24xf32>
    %cst_48 = arith.constant dense<0.000000e+00> : vector<8x24xf32>
    %236 = tpu.matmul %234, %235, %cst_48 {dimension_numbers = #tpu.dot_dimension_numbers<[1], [0], [0], [1], [0, 0, 1, 1], [], []>} : vector<8x16xf32>, vector<16x24xf32>, vector<8x24xf32> -> vector<8x24xf32>
    %237 = arith.addf %236, %14 : vector<8x24xf32>
    %238 = vector.extract_strided_slice %233 {offsets = [0, 0], sizes = [8, 24], strides = [1, 1]} : vector<8x48xf32> to vector<8x24xf32>
    %239 = vector.extract_strided_slice %237 {offsets = [0, 0], sizes = [8, 16], strides = [1, 1]} : vector<8x24xf32> to vector<8x16xf32>
    %240 = vector.extract_strided_slice %238 {offsets = [0, 0], sizes = [8, 16], strides = [1, 1]} : vector<8x24xf32> to vector<8x16xf32>
    %241 = arith.addf %239, %240 : vector<8x16xf32>
    %242 = arith.negf %241 : vector<8x16xf32>
    %243 = math.exp %242 : vector<8x16xf32>
    %cst_49 = arith.constant 1.000000e+00 : f32
    %244 = vector.broadcast %cst_49 : f32 to vector<8x16xf32>
    %245 = arith.addf %244, %243 : vector<8x16xf32>
    %246 = arith.divf %244, %245 : vector<8x16xf32>
    %247 = vector.extract_strided_slice %237 {offsets = [0, 16], sizes = [8, 8], strides = [1, 1]} : vector<8x24xf32> to vector<8x8xf32>
    %248 = vector.extract_strided_slice %246 {offsets = [0, 0], sizes = [8, 8], strides = [1, 1]} : vector<8x16xf32> to vector<8x8xf32>
    %249 = vector.extract_strided_slice %238 {offsets = [0, 16], sizes = [8, 8], strides = [1, 1]} : vector<8x24xf32> to vector<8x8xf32>
    %250 = arith.mulf %248, %249 : vector<8x8xf32>
    %251 = arith.addf %247, %250 : vector<8x8xf32>
    %252 = math.tanh %251 : vector<8x8xf32>
    %253 = vector.extract_strided_slice %246 {offsets = [0, 8], sizes = [8, 8], strides = [1, 1]} : vector<8x16xf32> to vector<8x8xf32>
    %cst_50 = arith.constant 1.000000e+00 : f32
    %254 = vector.broadcast %cst_50 : f32 to vector<8x8xf32>
    %255 = arith.subf %254, %253 : vector<8x8xf32>
    %256 = arith.mulf %255, %252 : vector<8x8xf32>
    %257 = arith.mulf %253, %203 : vector<8x8xf32>
    %258 = arith.addf %256, %257 : vector<8x8xf32>
    %c160 = arith.constant 160 : index
    %c0_51 = arith.constant 0 : index
    %259 = vector.load %arg3[%c160, %c0_51] : memref<216x128xf32, #tpu.memory_space<vmem>>, vector<8x24xf32>
    %cst_52 = arith.constant dense<0.000000e+00> : vector<8x24xf32>
    %260 = tpu.matmul %258, %259, %cst_52 {dimension_numbers = #tpu.dot_dimension_numbers<[1], [0], [0], [1], [0, 0, 1, 1], [], []>} : vector<8x8xf32>, vector<8x24xf32>, vector<8x24xf32> -> vector<8x24xf32>
    %c168 = arith.constant 168 : index
    %c0_53 = arith.constant 0 : index
    %261 = vector.load %arg3[%c168, %c0_53] : memref<216x128xf32, #tpu.memory_space<vmem>>, vector<1x24xf32>
    %262 = vector.broadcast %261 : vector<1x24xf32> to vector<8x24xf32>
    %263 = arith.addf %260, %262 : vector<8x24xf32>
    %264 = vector.extract_strided_slice %233 {offsets = [0, 24], sizes = [8, 24], strides = [1, 1]} : vector<8x48xf32> to vector<8x24xf32>
    %265 = vector.extract_strided_slice %263 {offsets = [0, 0], sizes = [8, 16], strides = [1, 1]} : vector<8x24xf32> to vector<8x16xf32>
    %266 = vector.extract_strided_slice %264 {offsets = [0, 0], sizes = [8, 16], strides = [1, 1]} : vector<8x24xf32> to vector<8x16xf32>
    %267 = arith.addf %265, %266 : vector<8x16xf32>
    %268 = arith.negf %267 : vector<8x16xf32>
    %269 = math.exp %268 : vector<8x16xf32>
    %cst_54 = arith.constant 1.000000e+00 : f32
    %270 = vector.broadcast %cst_54 : f32 to vector<8x16xf32>
    %271 = arith.addf %270, %269 : vector<8x16xf32>
    %272 = arith.divf %270, %271 : vector<8x16xf32>
    %273 = vector.extract_strided_slice %263 {offsets = [0, 16], sizes = [8, 8], strides = [1, 1]} : vector<8x24xf32> to vector<8x8xf32>
    %274 = vector.extract_strided_slice %272 {offsets = [0, 0], sizes = [8, 8], strides = [1, 1]} : vector<8x16xf32> to vector<8x8xf32>
    %275 = vector.extract_strided_slice %264 {offsets = [0, 16], sizes = [8, 8], strides = [1, 1]} : vector<8x24xf32> to vector<8x8xf32>
    %276 = arith.mulf %274, %275 : vector<8x8xf32>
    %277 = arith.addf %273, %276 : vector<8x8xf32>
    %278 = math.tanh %277 : vector<8x8xf32>
    %279 = vector.extract_strided_slice %272 {offsets = [0, 8], sizes = [8, 8], strides = [1, 1]} : vector<8x16xf32> to vector<8x8xf32>
    %cst_55 = arith.constant 1.000000e+00 : f32
    %280 = vector.broadcast %cst_55 : f32 to vector<8x8xf32>
    %281 = arith.subf %280, %279 : vector<8x8xf32>
    %282 = arith.mulf %281, %278 : vector<8x8xf32>
    %283 = arith.mulf %279, %227 : vector<8x8xf32>
    %284 = arith.addf %282, %283 : vector<8x8xf32>
    %c200 = arith.constant 200 : index
    %c0_56 = arith.constant 0 : index
    %285 = vector.load %arg3[%c200, %c0_56] : memref<216x128xf32, #tpu.memory_space<vmem>>, vector<8x128xf32>
    %cst_57 = arith.constant dense<0.000000e+00> : vector<8x128xf32>
    %286 = tpu.matmul %284, %285, %cst_57 {dimension_numbers = #tpu.dot_dimension_numbers<[1], [0], [0], [1], [0, 0, 1, 1], [], []>} : vector<8x8xf32>, vector<8x128xf32>, vector<8x128xf32> -> vector<8x128xf32>
    %c208 = arith.constant 208 : index
    %c0_58 = arith.constant 0 : index
    %287 = vector.load %arg3[%c208, %c0_58] : memref<216x128xf32, #tpu.memory_space<vmem>>, vector<1x128xf32>
    %288 = vector.broadcast %287 : vector<1x128xf32> to vector<8x128xf32>
    %289 = arith.addf %286, %288 : vector<8x128xf32>
    %c0_59 = arith.constant 0 : index
    %c0_60 = arith.constant 0 : index
    %290 = vector.load %arg4[%c0_59, %c0_60] : memref<8x128xf32, #tpu.memory_space<vmem>>, vector<8x128xf32>
    tpu.vector_store %arg4[%c0_59, %c0_60], %289 {strides = array<i32>} : memref<8x128xf32, #tpu.memory_space<vmem>>, vector<8x128xf32>,
    return
  }
}

</mosaic_0001>

<llo_original>
// kernel: forward.1
$region0: #{forward.1}
  #allocation0 [shape = 'u32[]', space=smem, size = 0x4, offset = 0x4, fixed_abs, tag = 'smem constant byte address 0x4 - core index']
  #allocation1 [shape = 'u32[72,128]{1,0:T(1,128)}', space=vmem, size = 0x9000, scoped, tag = 'internal scratch']
  %s0 = inlined_call_operand.vmem [shape: f32[384,43], index: 0, kind: input, shape index: {}]
  %s1 = inlined_call_operand.vmem [shape: f32[32,16], index: 1, kind: input, shape index: {}]
  %s2 = inlined_call_operand.vmem [shape: f32[8,16], index: 2, kind: input, shape index: {}]
  %s3 = inlined_call_operand.vmem [shape: f32[216,128], index: 3, kind: input, shape index: {}]
  %s4 = inlined_call_operand.vmem [shape: f32[8,128], index: 4, kind: output, shape index: {}]
  %s5 = sld [smem:[#allocation0]]
  $region26: #{forward.1} parent=0
    _
  %s7 = ssub.s32 1, %s5
  %s8 = scalar_select 0, %s7, %s5
  // Predicated region
  $region2: #{forward.1} parent=0 // pred_check
    _
  $region3: #{forward.1} parent=0 // pred_check_branch
    %10 = sbr.rel (0) target = $region5
  $region4: #{forward.1} parent=0 // pred_region
    _
  $region5: #{forward.1} parent=0 // pred_fallthru
    _
  // Predicated region
  $region6: #{forward.1} parent=0 // pred_check
    _
  $region7: #{forward.1} parent=0 // pred_check_branch
    %12 = sbr.rel (0) target = $region9
  $region8: #{forward.1} parent=0 // pred_region
    _
  $region9: #{forward.1} parent=0 // pred_fallthru
    _
  // Predicated region
  $region10: #{forward.1} parent=0 // pred_check
    _
  $region11: #{forward.1} parent=0 // pred_check_branch
    %14 = sbr.rel (0) target = $region13
  $region12: #{forward.1} parent=0 // pred_region
    _
  $region13: #{forward.1} parent=0 // pred_fallthru
    _
  // Predicated region
  $region14: #{forward.1} parent=0 // pred_check
    _
  $region15: #{forward.1} parent=0 // pred_check_branch
    %16 = sbr.rel (0) target = $region17
  $region16: #{forward.1} parent=0 // pred_region
    _
  $region17: #{forward.1} parent=0 // pred_fallthru
    _
  %v17 = vld [vmem:[%s0] sm:$0xff]
  %v18 = vld [vmem:[%s0 + $0x8] sm:$0xff]
  %v19 = vld [vmem:[%s0 + $0x10] sm:$0xff]
  %v20 = vld [vmem:[%s0 + $0x18] sm:$0xff]
  %v21 = vld [vmem:[%s0 + $0x20] sm:$0xff]
  %v22 = vld [vmem:[%s0 + $0x28] sm:$0xff]
  %v23 = vld [vmem:[%s0 + $0x30] sm:$0xff]
  %v24 = vld [vmem:[%s0 + $0x38] sm:$0xff]
  %v25 = vld [vmem:[%s0 + $0x40] sm:$0xff]
  %v26 = vld [vmem:[%s0 + $0x48] sm:$0xff]
  %v27 = vld [vmem:[%s0 + $0x50] sm:$0xff]
  %v28 = vld [vmem:[%s0 + $0x58] sm:$0xff]
  %v29 = vld [vmem:[%s0 + $0x60] sm:$0xff]
  %v30 = vld [vmem:[%s0 + $0x68] sm:$0xff]
  %v31 = vld [vmem:[%s0 + $0x70] sm:$0xff]
  %v32 = vld [vmem:[%s0 + $0x78] sm:$0xff]
  %v33 = vld [vmem:[%s0 + $0x80] sm:$0xff]
  %v34 = vld [vmem:[%s0 + $0x88] sm:$0xff]
  %v35 = vld [vmem:[%s0 + $0x90] sm:$0xff]
  %v36 = vld [vmem:[%s0 + $0x98] sm:$0xff]
  %v37 = vld [vmem:[%s0 + $0xa0] sm:$0xff]
  %v38 = vld [vmem:[%s0 + $0xa8] sm:$0xff]
  %v39 = vld [vmem:[%s0 + $0xb0] sm:$0xff]
  %v40 = vld [vmem:[%s0 + $0xb8] sm:$0xff]
  %v41 = vld [vmem:[%s0 + $0xc0] sm:$0xff]
  %v42 = vld [vmem:[%s0 + $0xc8] sm:$0xff]
  %v43 = vld [vmem:[%s0 + $0xd0] sm:$0xff]
  %v44 = vld [vmem:[%s0 + $0xd8] sm:$0xff]
  %v45 = vld [vmem:[%s0 + $0xe0] sm:$0xff]
  %v46 = vld [vmem:[%s0 + $0xe8] sm:$0xff]
  %v47 = vld [vmem:[%s0 + $0xf0] sm:$0xff]
  %v48 = vld [vmem:[%s0 + $0xf8] sm:$0xff]
  %v49 = vld [vmem:[%s0 + $0x100] sm:$0xff]
  %v50 = vld [vmem:[%s0 + $0x108] sm:$0xff]
  %v51 = vld [vmem:[%s0 + $0x110] sm:$0xff]
  %v52 = vld [vmem:[%s0 + $0x118] sm:$0xff]
  %v53 = vld [vmem:[%s0 + $0x120] sm:$0xff]
  %v54 = vld [vmem:[%s0 + $0x128] sm:$0xff]
  %v55 = vld [vmem:[%s0 + $0x130] sm:$0xff]
  %v56 = vld [vmem:[%s0 + $0x138] sm:$0xff]
  %v57 = vld [vmem:[%s0 + $0x140] sm:$0xff]
  %v58 = vld [vmem:[%s0 + $0x148] sm:$0xff]
  %v59 = vld [vmem:[%s0 + $0x150] sm:$0xff]
  %v60 = vld [vmem:[%s0 + $0x158] sm:$0xff]
  %v61 = vld [vmem:[%s0 + $0x160] sm:$0xff]
  %v62 = vld [vmem:[%s0 + $0x168] sm:$0xff]
  %v63 = vld [vmem:[%s0 + $0x170] sm:$0xff]
  %v64 = vld [vmem:[%s0 + $0x178] sm:$0xff]
  %v65 = vld [vmem:[%s3] sm:$0xff]
  %v66 = vld [vmem:[%s3 + $0x8] sm:$0xff]
  %v67 = vld [vmem:[%s3 + $0x10] sm:$0xff]
  %v68 = vld [vmem:[%s3 + $0x18] sm:$0xff]
  %v69 = vld [vmem:[%s3 + $0x20] sm:$0xff]
  %v70 = vld [vmem:[%s3 + $0x28] sm:$0x7]
  %vm71 = vcmask 351232
  %v73 = vsel %vm71, %v17, 0
  %v76 = vsel %vm71, %v18, 0
  %v79 = vsel %vm71, %v19, 0
  %v82 = vsel %vm71, %v20, 0
  %v85 = vsel %vm71, %v21, 0
  %v88 = vsel %vm71, %v22, 0
  %v91 = vsel %vm71, %v23, 0
  %v94 = vsel %vm71, %v24, 0
  %v97 = vsel %vm71, %v25, 0
  %v100 = vsel %vm71, %v26, 0
  %v103 = vsel %vm71, %v27, 0
  %v106 = vsel %vm71, %v28, 0
  %v109 = vsel %vm71, %v29, 0
  %v112 = vsel %vm71, %v30, 0
  %v115 = vsel %vm71, %v31, 0
  %v118 = vsel %vm71, %v32, 0
  %v121 = vsel %vm71, %v33, 0
  %v124 = vsel %vm71, %v34, 0
  %v127 = vsel %vm71, %v35, 0
  %v130 = vsel %vm71, %v36, 0
  %v133 = vsel %vm71, %v37, 0
  %v136 = vsel %vm71, %v38, 0
  %v139 = vsel %vm71, %v39, 0
  %v142 = vsel %vm71, %v40, 0
  %v145 = vsel %vm71, %v41, 0
  %v148 = vsel %vm71, %v42, 0
  %v151 = vsel %vm71, %v43, 0
  %v154 = vsel %vm71, %v44, 0
  %v157 = vsel %vm71, %v45, 0
  %v160 = vsel %vm71, %v46, 0
  %v163 = vsel %vm71, %v47, 0
  %v166 = vsel %vm71, %v48, 0
  %v169 = vsel %vm71, %v49, 0
  %v172 = vsel %vm71, %v50, 0
  %v175 = vsel %vm71, %v51, 0
  %v178 = vsel %vm71, %v52, 0
  %v181 = vsel %vm71, %v53, 0
  %v184 = vsel %vm71, %v54, 0
  %v187 = vsel %vm71, %v55, 0
  %v190 = vsel %vm71, %v56, 0
  %v193 = vsel %vm71, %v57, 0
  %v196 = vsel %vm71, %v58, 0
  %v199 = vsel %vm71, %v59, 0
  %v202 = vsel %vm71, %v60, 0
  %v205 = vsel %vm71, %v61, 0
  %v208 = vsel %vm71, %v62, 0
  %v211 = vsel %vm71, %v63, 0
  %v214 = vsel %vm71, %v64, 0
  %vm216 = vcmask 1042432
  %v218 = vsel %vm216, %v70, 0
  %220 = vmatpush.msra.mxu0 0.0
  %221 = vmatpush.msra.mxu0 0.0
  %222 = vmatpush.msra.mxu0 0.0
  %223 = vmatpush.msra.mxu0 0.0
  %224 = vmatpush.msra.mxu0 0.0
  %225 = vmatpush.msra.mxu0 0.0
  %226 = vmatpush.msra.mxu0 0.0
  %227 = vmatpush.msra.mxu0 0.0
  %228 = vmatpush.msra.mxu0 0.0
  %229 = vmatpush.msra.mxu0 0.0
  %230 = vmatpush.msra.mxu0 %v218
  %231 = vmatpush.msra.mxu0 %v69
  %232 = vmatpush.msra.mxu0 %v68
  %233 = vmatpush.msra.mxu0 %v67
  %234 = vmatpush.msra.mxu0 %v66
  %235 = vmatpush.msra.mxu0 %v65
  %236 = vmatmul.f32.gmra.mxu0 %v73
  %v237 = vpop.f32.mrf.mxu0
  %v238 = vadd.f32 0.0, %v237
  %239 = vmatmul.f32.gmra.mxu0 %v76
  %v240 = vpop.f32.mrf.mxu0
  %v241 = vadd.f32 0.0, %v240
  %242 = vmatmul.f32.gmra.mxu0 %v79
  %v243 = vpop.f32.mrf.mxu0
  %v244 = vadd.f32 0.0, %v243
  %245 = vmatmul.f32.gmra.mxu0 %v82
  %v246 = vpop.f32.mrf.mxu0
  %v247 = vadd.f32 0.0, %v246
  %248 = vmatmul.f32.gmra.mxu0 %v85
  %v249 = vpop.f32.mrf.mxu0
  %v250 = vadd.f32 0.0, %v249
  %251 = vmatmul.f32.gmra.mxu0 %v88
  %v252 = vpop.f32.mrf.mxu0
  %v253 = vadd.f32 0.0, %v252
  %254 = vmatmul.f32.gmra.mxu0 %v91
  %v255 = vpop.f32.mrf.mxu0
  %v256 = vadd.f32 0.0, %v255
  %257 = vmatmul.f32.gmra.mxu0 %v94
  %v258 = vpop.f32.mrf.mxu0
  %v259 = vadd.f32 0.0, %v258
  %260 = vmatmul.f32.gmra.mxu0 %v97
  %v261 = vpop.f32.mrf.mxu0
  %v262 = vadd.f32 0.0, %v261
  %263 = vmatmul.f32.gmra.mxu0 %v100
  %v264 = vpop.f32.mrf.mxu0
  %v265 = vadd.f32 0.0, %v264
  %266 = vmatmul.f32.gmra.mxu0 %v103
  %v267 = vpop.f32.mrf.mxu0
  %v268 = vadd.f32 0.0, %v267
  %269 = vmatmul.f32.gmra.mxu0 %v106
  %v270 = vpop.f32.mrf.mxu0
  %v271 = vadd.f32 0.0, %v270
  %272 = vmatmul.f32.gmra.mxu0 %v109
  %v273 = vpop.f32.mrf.mxu0
  %v274 = vadd.f32 0.0, %v273
  %275 = vmatmul.f32.gmra.mxu0 %v112
  %v276 = vpop.f32.mrf.mxu0
  %v277 = vadd.f32 0.0, %v276
  %278 = vmatmul.f32.gmra.mxu0 %v115
  %v279 = vpop.f32.mrf.mxu0
  %v280 = vadd.f32 0.0, %v279
  %281 = vmatmul.f32.gmra.mxu0 %v118
  %v282 = vpop.f32.mrf.mxu0
  %v283 = vadd.f32 0.0, %v282
  %284 = vmatmul.f32.gmra.mxu0 %v121
  %v285 = vpop.f32.mrf.mxu0
  %v286 = vadd.f32 0.0, %v285
  %287 = vmatmul.f32.gmra.mxu0 %v124
  %v288 = vpop.f32.mrf.mxu0
  %v289 = vadd.f32 0.0, %v288
  %290 = vmatmul.f32.gmra.mxu0 %v127
  %v291 = vpop.f32.mrf.mxu0
  %v292 = vadd.f32 0.0, %v291
  %293 = vmatmul.f32.gmra.mxu0 %v130
  %v294 = vpop.f32.mrf.mxu0
  %v295 = vadd.f32 0.0, %v294
  %296 = vmatmul.f32.gmra.mxu0 %v133
  %v297 = vpop.f32.mrf.mxu0
  %v298 = vadd.f32 0.0, %v297
  %299 = vmatmul.f32.gmra.mxu0 %v136
  %v300 = vpop.f32.mrf.mxu0
  %v301 = vadd.f32 0.0, %v300
  %302 = vmatmul.f32.gmra.mxu0 %v139
  %v303 = vpop.f32.mrf.mxu0
  %v304 = vadd.f32 0.0, %v303
  %305 = vmatmul.f32.gmra.mxu0 %v142
  %v306 = vpop.f32.mrf.mxu0
  %v307 = vadd.f32 0.0, %v306
  %308 = vmatmul.f32.gmra.mxu0 %v145
  %v309 = vpop.f32.mrf.mxu0
  %v310 = vadd.f32 0.0, %v309
  %311 = vmatmul.f32.gmra.mxu0 %v148
  %v312 = vpop.f32.mrf.mxu0
  %v313 = vadd.f32 0.0, %v312
  %314 = vmatmul.f32.gmra.mxu0 %v151
  %v315 = vpop.f32.mrf.mxu0
  %v316 = vadd.f32 0.0, %v315
  %317 = vmatmul.f32.gmra.mxu0 %v154
  %v318 = vpop.f32.mrf.mxu0
  %v319 = vadd.f32 0.0, %v318
  %320 = vmatmul.f32.gmra.mxu0 %v157
  %v321 = vpop.f32.mrf.mxu0
  %v322 = vadd.f32 0.0, %v321
  %323 = vmatmul.f32.gmra.mxu0 %v160
  %v324 = vpop.f32.mrf.mxu0
  %v325 = vadd.f32 0.0, %v324
  %326 = vmatmul.f32.gmra.mxu0 %v163
  %v327 = vpop.f32.mrf.mxu0
  %v328 = vadd.f32 0.0, %v327
  %329 = vmatmul.f32.gmra.mxu0 %v166
  %v330 = vpop.f32.mrf.mxu0
  %v331 = vadd.f32 0.0, %v330
  %332 = vmatmul.f32.gmra.mxu0 %v169
  %v333 = vpop.f32.mrf.mxu0
  %v334 = vadd.f32 0.0, %v333
  %335 = vmatmul.f32.gmra.mxu0 %v172
  %v336 = vpop.f32.mrf.mxu0
  %v337 = vadd.f32 0.0, %v336
  %338 = vmatmul.f32.gmra.mxu0 %v175
  %v339 = vpop.f32.mrf.mxu0
  %v340 = vadd.f32 0.0, %v339
  %341 = vmatmul.f32.gmra.mxu0 %v178
  %v342 = vpop.f32.mrf.mxu0
  %v343 = vadd.f32 0.0, %v342
  %344 = vmatmul.f32.gmra.mxu0 %v181
  %v345 = vpop.f32.mrf.mxu0
  %v346 = vadd.f32 0.0, %v345
  %347 = vmatmul.f32.gmra.mxu0 %v184
  %v348 = vpop.f32.mrf.mxu0
  %v349 = vadd.f32 0.0, %v348
  %350 = vmatmul.f32.gmra.mxu0 %v187
  %v351 = vpop.f32.mrf.mxu0
  %v352 = vadd.f32 0.0, %v351
  %353 = vmatmul.f32.gmra.mxu0 %v190
  %v354 = vpop.f32.mrf.mxu0
  %v355 = vadd.f32 0.0, %v354
  %356 = vmatmul.f32.gmra.mxu0 %v193
  %v357 = vpop.f32.mrf.mxu0
  %v358 = vadd.f32 0.0, %v357
  %359 = vmatmul.f32.gmra.mxu0 %v196
  %v360 = vpop.f32.mrf.mxu0
  %v361 = vadd.f32 0.0, %v360
  %362 = vmatmul.f32.gmra.mxu0 %v199
  %v363 = vpop.f32.mrf.mxu0
  %v364 = vadd.f32 0.0, %v363
  %365 = vmatmul.f32.gmra.mxu0 %v202
  %v366 = vpop.f32.mrf.mxu0
  %v367 = vadd.f32 0.0, %v366
  %368 = vmatmul.f32.gmra.mxu0 %v205
  %v369 = vpop.f32.mrf.mxu0
  %v370 = vadd.f32 0.0, %v369
  %371 = vmatmul.f32.gmra.mxu0 %v208
  %v372 = vpop.f32.mrf.mxu0
  %v373 = vadd.f32 0.0, %v372
  %374 = vmatmul.f32.gmra.mxu0 %v211
  %v375 = vpop.f32.mrf.mxu0
  %v376 = vadd.f32 0.0, %v375
  %377 = vmatmul.f32.gmra.mxu0 %v214
  %v378 = vpop.f32.mrf.mxu0
  %v379 = vadd.f32 0.0, %v378
  %380 = vdwg.mxu0
  %vm381 = vcmask 195584
  %v382 = vsel %vm381, %v238, -inf
  %v383 = vsel %vm381, %v241, -inf
  %v384 = vmax.f32 %v382, %v383
  %v385 = vsel %vm381, %v244, -inf
  %v386 = vmax.f32 %v384, %v385
  %v387 = vsel %vm381, %v247, -inf
  %v388 = vmax.f32 %v386, %v387
  %v389 = vsel %vm381, %v250, -inf
  %v390 = vmax.f32 %v388, %v389
  %v391 = vsel %vm381, %v253, -inf
  %v392 = vmax.f32 %v390, %v391
  %v393 = vrot.slane %v392, 4
  %v394 = vmax.f32 %v392, %v393
  %v395 = vrot.slane %v394, 2
  %v396 = vmax.f32 %v394, %v395
  %v397 = vrot.slane %v396, 1
  %v398 = vmax.f32 %v396, %v397
  %v399 = vsel %vm381, %v256, -inf
  %v400 = vsel %vm381, %v259, -inf
  %v401 = vmax.f32 %v399, %v400
  %v402 = vsel %vm381, %v262, -inf
  %v403 = vmax.f32 %v401, %v402
  %v404 = vsel %vm381, %v265, -inf
  %v405 = vmax.f32 %v403, %v404
  %v406 = vsel %vm381, %v268, -inf
  %v407 = vmax.f32 %v405, %v406
  %v408 = vsel %vm381, %v271, -inf
  %v409 = vmax.f32 %v407, %v408
  %v410 = vrot.slane %v409, 4
  %v411 = vmax.f32 %v409, %v410
  %v412 = vrot.slane %v411, 2
  %v413 = vmax.f32 %v411, %v412
  %v414 = vrot.slane %v413, 1
  %v415 = vmax.f32 %v413, %v414
  %v416 = vsel %vm381, %v274, -inf
  %v417 = vsel %vm381, %v277, -inf
  %v418 = vmax.f32 %v416, %v417
  %v419 = vsel %vm381, %v280, -inf
  %v420 = vmax.f32 %v418, %v419
  %v421 = vsel %vm381, %v283, -inf
  %v422 = vmax.f32 %v420, %v421
  %v423 = vsel %vm381, %v286, -inf
  %v424 = vmax.f32 %v422, %v423
  %v425 = vsel %vm381, %v289, -inf
  %v426 = vmax.f32 %v424, %v425
  %v427 = vrot.slane %v426, 4
  %v428 = vmax.f32 %v426, %v427
  %v429 = vrot.slane %v428, 2
  %v430 = vmax.f32 %v428, %v429
  %v431 = vrot.slane %v430, 1
  %v432 = vmax.f32 %v430, %v431
  %v433 = vsel %vm381, %v292, -inf
  %v434 = vsel %vm381, %v295, -inf
  %v435 = vmax.f32 %v433, %v434
  %v436 = vsel %vm381, %v298, -inf
  %v437 = vmax.f32 %v435, %v436
  %v438 = vsel %vm381, %v301, -inf
  %v439 = vmax.f32 %v437, %v438
  %v440 = vsel %vm381, %v304, -inf
  %v441 = vmax.f32 %v439, %v440
  %v442 = vsel %vm381, %v307, -inf
  %v443 = vmax.f32 %v441, %v442
  %v444 = vrot.slane %v443, 4
  %v445 = vmax.f32 %v443, %v444
  %v446 = vrot.slane %v445, 2
  %v447 = vmax.f32 %v445, %v446
  %v448 = vrot.slane %v447, 1
  %v449 = vmax.f32 %v447, %v448
  %v450 = vsel %vm381, %v310, -inf
  %v451 = vsel %vm381, %v313, -inf
  %v452 = vmax.f32 %v450, %v451
  %v453 = vsel %vm381, %v316, -inf
  %v454 = vmax.f32 %v452, %v453
  %v455 = vsel %vm381, %v319, -inf
  %v456 = vmax.f32 %v454, %v455
  %v457 = vsel %vm381, %v322, -inf
  %v458 = vmax.f32 %v456, %v457
  %v459 = vsel %vm381, %v325, -inf
  %v460 = vmax.f32 %v458, %v459
  %v461 = vrot.slane %v460, 4
  %v462 = vmax.f32 %v460, %v461
  %v463 = vrot.slane %v462, 2
  %v464 = vmax.f32 %v462, %v463
  %v465 = vrot.slane %v464, 1
  %v466 = vmax.f32 %v464, %v465
  %v467 = vsel %vm381, %v328, -inf
  %v468 = vsel %vm381, %v331, -inf
  %v469 = vmax.f32 %v467, %v468
  %v470 = vsel %vm381, %v334, -inf
  %v471 = vmax.f32 %v469, %v470
  %v472 = vsel %vm381, %v337, -inf
  %v473 = vmax.f32 %v471, %v472
  %v474 = vsel %vm381, %v340, -inf
  %v475 = vmax.f32 %v473, %v474
  %v476 = vsel %vm381, %v343, -inf
  %v477 = vmax.f32 %v475, %v476
  %v478 = vrot.slane %v477, 4
  %v479 = vmax.f32 %v477, %v478
  %v480 = vrot.slane %v479, 2
  %v481 = vmax.f32 %v479, %v480
  %v482 = vrot.slane %v481, 1
  %v483 = vmax.f32 %v481, %v482
  %v484 = vsel %vm381, %v346, -inf
  %v485 = vsel %vm381, %v349, -inf
  %v486 = vmax.f32 %v484, %v485
  %v487 = vsel %vm381, %v352, -inf
  %v488 = vmax.f32 %v486, %v487
  %v489 = vsel %vm381, %v355, -inf
  %v490 = vmax.f32 %v488, %v489
  %v491 = vsel %vm381, %v358, -inf
  %v492 = vmax.f32 %v490, %v491
  %v493 = vsel %vm381, %v361, -inf
  %v494 = vmax.f32 %v492, %v493
  %v495 = vrot.slane %v494, 4
  %v496 = vmax.f32 %v494, %v495
  %v497 = vrot.slane %v496, 2
  %v498 = vmax.f32 %v496, %v497
  %v499 = vrot.slane %v498, 1
  %v500 = vmax.f32 %v498, %v499
  %v501 = vsel %vm381, %v364, -inf
  %v502 = vsel %vm381, %v367, -inf
  %v503 = vmax.f32 %v501, %v502
  %v504 = vsel %vm381, %v370, -inf
  %v505 = vmax.f32 %v503, %v504
  %v506 = vsel %vm381, %v373, -inf
  %v507 = vmax.f32 %v505, %v506
  %v508 = vsel %vm381, %v376, -inf
  %v509 = vmax.f32 %v507, %v508
  %v510 = vsel %vm381, %v379, -inf
  %v511 = vmax.f32 %v509, %v510
  %v512 = vrot.slane %v511, 4
  %v513 = vmax.f32 %v511, %v512
  %v514 = vrot.slane %v513, 2
  %v515 = vmax.f32 %v513, %v514
  %v516 = vrot.slane %v515, 1
  %v517 = vmax.f32 %v515, %v516
  %v518 = vld [vmem:[%s3 + $0x30] sm:$0x1]
  %v519 = vperm.slane %v518, 0
  %v520 = vadd.f32 %v398, %v519
  %v521 = vadd.f32 %v415, %v519
  %v522 = vadd.f32 %v432, %v519
  %v523 = vadd.f32 %v449, %v519
  %v524 = vadd.f32 %v466, %v519
  %v525 = vadd.f32 %v483, %v519
  %v526 = vadd.f32 %v500, %v519
  %v527 = vadd.f32 %v517, %v519
  %v528 = vld [vmem:[%s3 + $0x38] sm:$0xff]
  %v529 = vld [vmem:[%s3 + $0x40] sm:$0xff]
  %v530 = vld [vmem:[%s3 + $0x48] sm:$0xff]
  %v531 = vld [vmem:[%s3 + $0x50] sm:$0x1]
  %v532 = vperm.slane %v531, 0
  %v541 = vrot.slane %v521, 7
  %vm542 = vcmask 1041409
  %v543 = vsel %vm542, %v541, %v520
  %v544 = vrot.slane %v522, 6
  %vm545 = vcmask 1042434
  %v546 = vsel %vm545, %v544, %v543
  %v547 = vrot.slane %v523, 5
  %vm548 = vcmask 1043459
  %v549 = vsel %vm548, %v547, %v546
  %v550 = vrot.slane %v524, 4
  %vm551 = vcmask 1044484
  %v552 = vsel %vm551, %v550, %v549
  %v553 = vrot.slane %v525, 3
  %vm554 = vcmask 1045509
  %v555 = vsel %vm554, %v553, %v552
  %v556 = vrot.slane %v526, 2
  %vm557 = vcmask 1046534
  %v558 = vsel %vm557, %v556, %v555
  %v559 = vrot.slane %v527, 1
  %vm560 = vcmask 1047559
  %v561 = vsel %vm560, %v559, %v558
  %v562 = vsel %vm381, %v561, 0
  %564 = vmatpush.msra.mxu0 0.0
  %565 = vmatpush.msra.mxu0 0.0
  %566 = vmatpush.msra.mxu0 0.0
  %567 = vmatpush.msra.mxu0 0.0
  %568 = vmatpush.msra.mxu0 0.0
  %569 = vmatpush.msra.mxu0 0.0
  %570 = vmatpush.msra.mxu0 0.0
  %571 = vmatpush.msra.mxu0 0.0
  %572 = vmatpush.msra.mxu0 0.0
  %573 = vmatpush.msra.mxu0 0.0
  %574 = vmatpush.msra.mxu0 0.0
  %575 = vmatpush.msra.mxu0 0.0
  %576 = vmatpush.msra.mxu0 0.0
  %577 = vmatpush.msra.mxu0 %v530
  %578 = vmatpush.msra.mxu0 %v529
  %579 = vmatpush.msra.mxu0 %v528
  %580 = vmatmul.f32.gmra.mxu0 %v562
  %v581 = vpop.f32.mrf.mxu0
  %v582 = vadd.f32 %v532, %v581
  %583 = vdwg.mxu0
  %v584 = vld [vmem:[%s1] sm:$0xff]
  %v585 = vld [vmem:[%s1 + $0x8] sm:$0xff]
  %v586 = vld [vmem:[%s1 + $0x10] sm:$0xff]
  %v587 = vld [vmem:[%s1 + $0x18] sm:$0xff]
  %v588 = vld [vmem:[%s3 + $0x58] sm:$0xff]
  %v589 = vld [vmem:[%s3 + $0x60] sm:$0xff]
  %vm590 = vcmask 130048
  %v592 = vsel %vm590, %v584, 0
  %v595 = vsel %vm590, %v585, 0
  %v598 = vsel %vm590, %v586, 0
  %v601 = vsel %vm590, %v587, 0
  %603 = vmatpush.msra.mxu0 0.0
  %604 = vmatpush.msra.mxu0 0.0
  %605 = vmatpush.msra.mxu0 0.0
  %606 = vmatpush.msra.mxu0 0.0
  %607 = vmatpush.msra.mxu0 0.0
  %608 = vmatpush.msra.mxu0 0.0
  %609 = vmatpush.msra.mxu0 0.0
  %610 = vmatpush.msra.mxu0 0.0
  %611 = vmatpush.msra.mxu0 0.0
  %612 = vmatpush.msra.mxu0 0.0
  %613 = vmatpush.msra.mxu0 0.0
  %614 = vmatpush.msra.mxu0 0.0
  %615 = vmatpush.msra.mxu0 0.0
  %616 = vmatpush.msra.mxu0 0.0
  %617 = vmatpush.msra.mxu0 %v589
  %618 = vmatpush.msra.mxu0 %v588
  %619 = vmatmul.f32.gmra.mxu0 %v592
  %v620 = vpop.f32.mrf.mxu0
  %v621 = vadd.f32 0.0, %v620
  %622 = vmatmul.f32.gmra.mxu0 %v595
  %v623 = vpop.f32.mrf.mxu0
  %v624 = vadd.f32 0.0, %v623
  %625 = vmatmul.f32.gmra.mxu0 %v598
  %v626 = vpop.f32.mrf.mxu0
  %v627 = vadd.f32 0.0, %v626
  %628 = vmatmul.f32.gmra.mxu0 %v601
  %v629 = vpop.f32.mrf.mxu0
  %v630 = vadd.f32 0.0, %v629
  %631 = vdwg.mxu0
  %v632 = vld [vmem:[%s3 + $0x78] sm:$0xff]
  %v633 = vld [vmem:[%s3 + $0x80] sm:$0xff]
  %v634 = vld [vmem:[%s3 + $0x88] sm:$0x1]
  %v635 = vld [vmem:[%s3 + $0x68] sm:$0xff]
  %v636 = vld [vmem:[%s3 + $0x70] sm:$0x1]
  %v637 = vperm.slane %v634, 0
  %v639 = vsel %vm590, 0.0, 0
  %641 = vmatpush.msra.mxu0 0.0
  %642 = vmatpush.msra.mxu0 0.0
  %643 = vmatpush.msra.mxu0 0.0
  %644 = vmatpush.msra.mxu0 0.0
  %645 = vmatpush.msra.mxu0 0.0
  %646 = vmatpush.msra.mxu0 0.0
  %647 = vmatpush.msra.mxu0 0.0
  %648 = vmatpush.msra.mxu0 0.0
  %649 = vmatpush.msra.mxu0 0.0
  %650 = vmatpush.msra.mxu0 0.0
  %651 = vmatpush.msra.mxu0 0.0
  %652 = vmatpush.msra.mxu0 0.0
  %653 = vmatpush.msra.mxu0 0.0
  %654 = vmatpush.msra.mxu0 0.0
  %655 = vmatpush.msra.mxu0 %v633
  %656 = vmatpush.msra.mxu0 %v632
  %657 = vmatmul.f32.gmra.mxu0 %v639
  %v658 = vpop.f32.mrf.mxu0
  %v659 = vadd.f32 %v637, %v658
  %660 = vdwg.mxu0
  %v661 = vadd.f32 %v621, %v582
  %v662 = vadd.f32 %v661, %v659
  %v663 = vxor.u32 %v662, 2147483648
  %v664 = vmul.f32 %v663, 1.442695
  %v665 = vpow.pop %v664
  %v666 = vadd.f32 %v665, 1.0
  %v667 = vrcp.pop %v666
  %v668 = vmul.f32 %v666, %v667
  %v669 = vsub.f32 1.0, %v668
  %v670 = vmul.f32 %v667, %v669
  %v671 = vadd.f32 %v667, %v670
  %vm672 = vweird.f32 %v666
  %vm673 = vweird.f32 %v667
  %vm674 = vmor %vm672, %vm673
  %v675 = vsel %vm674, %v667, %v671
  %v676 = vand.u32 2147483647, %v666
  %vm677 = vcmp.eq.f32.partialorder %v676, 8.507059e+37
  %v678 = vand.u32 %v666, 2147483648
  %v679 = vor.u32 1.1754944e-38, %v678
  %v680 = vsel %vm677, %v679, %v675
  %v681 = vmul.f32 1.0, %v680
  %683 = vrot.lane.b32.xlu0 %v659, 112
  %v684 = vpop.permute.xlu0 %683
  %v686 = vmul.f32 %v681, %v684
  %688 = vrot.lane.b32.xlu0 %v686, 16
  %v689 = vpop.permute.xlu0 %688
  %v691 = vadd.f32 %v661, %v689
  %v692 = vtanh.pop %v691
  %v693 = vsub.f32 1.0, %v681
  %695 = vrot.lane.b32.xlu0 %v692, 120
  %v696 = vpop.permute.xlu0 %695
  %v698 = vmul.f32 %v693, %v696
  %v699 = vmul.f32 %v681, 0.0
  %v700 = vadd.f32 %v698, %v699
  %v701 = vperm.slane %v636, 0
  %703 = vrot.lane.b32.xlu0 %v700, 120
  %v704 = vpop.permute.xlu0 %703
  %vm705 = vcmask 64512
  %v706 = vsel %vm705, %v704, 0
  %708 = vmatpush.msra.mxu0 0.0
  %709 = vmatpush.msra.mxu0 0.0
  %710 = vmatpush.msra.mxu0 0.0
  %711 = vmatpush.msra.mxu0 0.0
  %712 = vmatpush.msra.mxu0 0.0
  %713 = vmatpush.msra.mxu0 0.0
  %714 = vmatpush.msra.mxu0 0.0
  %715 = vmatpush.msra.mxu0 0.0
  %716 = vmatpush.msra.mxu0 0.0
  %717 = vmatpush.msra.mxu0 0.0
  %718 = vmatpush.msra.mxu0 0.0
  %719 = vmatpush.msra.mxu0 0.0
  %720 = vmatpush.msra.mxu0 0.0
  %721 = vmatpush.msra.mxu0 0.0
  %722 = vmatpush.msra.mxu0 0.0
  %723 = vmatpush.msra.mxu0 %v635
  %724 = vmatmul.f32.gmra.mxu0 %v706
  %v725 = vpop.f32.mrf.mxu0
  %v726 = vadd.f32 %v701, %v725
  %727 = vdwg.mxu0
  %728 = vrot.lane.b32.xlu0 %v659, 104
  %v729 = vpop.permute.xlu0 %728
  %v731 = vadd.f32 %v726, %v729
  %v732 = vxor.u32 %v731, 2147483648
  %v733 = vmul.f32 %v732, 1.442695
  %v734 = vpow.pop %v733
  %v735 = vadd.f32 %v734, 1.0
  %v736 = vrcp.pop %v735
  %v737 = vmul.f32 %v735, %v736
  %v738 = vsub.f32 1.0, %v737
  %v739 = vmul.f32 %v736, %v738
  %v740 = vadd.f32 %v736, %v739
  %vm741 = vweird.f32 %v735
  %vm742 = vweird.f32 %v736
  %vm743 = vmor %vm741, %vm742
  %v744 = vsel %vm743, %v736, %v740
  %v745 = vand.u32 2147483647, %v735
  %vm746 = vcmp.eq.f32.partialorder %v745, 8.507059e+37
  %v747 = vand.u32 %v735, 2147483648
  %v748 = vor.u32 1.1754944e-38, %v747
  %v749 = vsel %vm746, %v748, %v744
  %v750 = vmul.f32 1.0, %v749
  %751 = vrot.lane.b32.xlu0 %v659, 88
  %v752 = vpop.permute.xlu0 %751
  %v754 = vmul.f32 %v750, %v752
  %756 = vrot.lane.b32.xlu0 %v754, 16
  %v757 = vpop.permute.xlu0 %756
  %v759 = vadd.f32 %v726, %v757
  %v760 = vtanh.pop %v759
  %v761 = vsub.f32 1.0, %v750
  %763 = vrot.lane.b32.xlu0 %v760, 120
  %v764 = vpop.permute.xlu0 %763
  %v766 = vmul.f32 %v761, %v764
  %v767 = vmul.f32 %v750, 0.0
  %v768 = vadd.f32 %v766, %v767
  %v770 = vsel %vm705, %v704, %v768
  %v772 = vsel %vm590, %v770, 0
  %774 = vmatpush.msra.mxu0 0.0
  %775 = vmatpush.msra.mxu0 0.0
  %776 = vmatpush.msra.mxu0 0.0
  %777 = vmatpush.msra.mxu0 0.0
  %778 = vmatpush.msra.mxu0 0.0
  %779 = vmatpush.msra.mxu0 0.0
  %780 = vmatpush.msra.mxu0 0.0
  %781 = vmatpush.msra.mxu0 0.0
  %782 = vmatpush.msra.mxu0 0.0
  %783 = vmatpush.msra.mxu0 0.0
  %784 = vmatpush.msra.mxu0 0.0
  %785 = vmatpush.msra.mxu0 0.0
  %786 = vmatpush.msra.mxu0 0.0
  %787 = vmatpush.msra.mxu0 0.0
  %788 = vmatpush.msra.mxu0 %v633
  %789 = vmatpush.msra.mxu0 %v632
  %790 = vmatmul.f32.gmra.mxu0 %v772
  %v791 = vpop.f32.mrf.mxu0
  %v792 = vadd.f32 %v637, %v791
  %793 = vdwg.mxu0
  %v794 = vadd.f32 %v624, %v582
  %v795 = vadd.f32 %v794, %v792
  %v796 = vxor.u32 %v795, 2147483648
  %v797 = vmul.f32 %v796, 1.442695
  %v798 = vpow.pop %v797
  %v799 = vadd.f32 %v798, 1.0
  %v800 = vrcp.pop %v799
  %v801 = vmul.f32 %v799, %v800
  %v802 = vsub.f32 1.0, %v801
  %v803 = vmul.f32 %v800, %v802
  %v804 = vadd.f32 %v800, %v803
  %vm805 = vweird.f32 %v799
  %vm806 = vweird.f32 %v800
  %vm807 = vmor %vm805, %vm806
  %v808 = vsel %vm807, %v800, %v804
  %v809 = vand.u32 2147483647, %v799
  %vm810 = vcmp.eq.f32.partialorder %v809, 8.507059e+37
  %v811 = vand.u32 %v799, 2147483648
  %v812 = vor.u32 1.1754944e-38, %v811
  %v813 = vsel %vm810, %v812, %v808
  %v814 = vmul.f32 1.0, %v813
  %816 = vrot.lane.b32.xlu0 %v792, 112
  %v817 = vpop.permute.xlu0 %816
  %v819 = vmul.f32 %v814, %v817
  %821 = vrot.lane.b32.xlu0 %v819, 16
  %v822 = vpop.permute.xlu0 %821
  %v824 = vadd.f32 %v794, %v822
  %v825 = vtanh.pop %v824
  %v826 = vsub.f32 1.0, %v814
  %828 = vrot.lane.b32.xlu0 %v825, 120
  %v829 = vpop.permute.xlu0 %828
  %v831 = vmul.f32 %v826, %v829
  %v832 = vmul.f32 %v814, %v700
  %v833 = vadd.f32 %v831, %v832
  %835 = vrot.lane.b32.xlu0 %v833, 120
  %v836 = vpop.permute.xlu0 %835
  %v837 = vsel %vm705, %v836, 0
  %839 = vmatpush.msra.mxu0 0.0
  %840 = vmatpush.msra.mxu0 0.0
  %841 = vmatpush.msra.mxu0 0.0
  %842 = vmatpush.msra.mxu0 0.0
  %843 = vmatpush.msra.mxu0 0.0
  %844 = vmatpush.msra.mxu0 0.0
  %845 = vmatpush.msra.mxu0 0.0
  %846 = vmatpush.msra.mxu0 0.0
  %847 = vmatpush.msra.mxu0 0.0
  %848 = vmatpush.msra.mxu0 0.0
  %849 = vmatpush.msra.mxu0 0.0
  %850 = vmatpush.msra.mxu0 0.0
  %851 = vmatpush.msra.mxu0 0.0
  %852 = vmatpush.msra.mxu0 0.0
  %853 = vmatpush.msra.mxu0 0.0
  %854 = vmatpush.msra.mxu0 %v635
  %855 = vmatmul.f32.gmra.mxu0 %v837
  %v856 = vpop.f32.mrf.mxu0
  %v857 = vadd.f32 %v701, %v856
  %858 = vdwg.mxu0
  %859 = vrot.lane.b32.xlu0 %v792, 104
  %v860 = vpop.permute.xlu0 %859
  %v862 = vadd.f32 %v857, %v860
  %v863 = vxor.u32 %v862, 2147483648
  %v864 = vmul.f32 %v863, 1.442695
  %v865 = vpow.pop %v864
  %v866 = vadd.f32 %v865, 1.0
  %v867 = vrcp.pop %v866
  %v868 = vmul.f32 %v866, %v867
  %v869 = vsub.f32 1.0, %v868
  %v870 = vmul.f32 %v867, %v869
  %v871 = vadd.f32 %v867, %v870
  %vm872 = vweird.f32 %v866
  %vm873 = vweird.f32 %v867
  %vm874 = vmor %vm872, %vm873
  %v875 = vsel %vm874, %v867, %v871
  %v876 = vand.u32 2147483647, %v866
  %vm877 = vcmp.eq.f32.partialorder %v876, 8.507059e+37
  %v878 = vand.u32 %v866, 2147483648
  %v879 = vor.u32 1.1754944e-38, %v878
  %v880 = vsel %vm877, %v879, %v875
  %v881 = vmul.f32 1.0, %v880
  %882 = vrot.lane.b32.xlu0 %v792, 88
  %v883 = vpop.permute.xlu0 %882
  %v885 = vmul.f32 %v881, %v883
  %887 = vrot.lane.b32.xlu0 %v885, 16
  %v888 = vpop.permute.xlu0 %887
  %v890 = vadd.f32 %v857, %v888
  %v891 = vtanh.pop %v890
  %v892 = vsub.f32 1.0, %v881
  %894 = vrot.lane.b32.xlu0 %v891, 120
  %v895 = vpop.permute.xlu0 %894
  %v897 = vmul.f32 %v892, %v895
  %v898 = vmul.f32 %v881, %v768
  %v899 = vadd.f32 %v897, %v898
  %v901 = vsel %vm705, %v836, %v899
  %v903 = vsel %vm590, %v901, 0
  %905 = vmatpush.msra.mxu0 0.0
  %906 = vmatpush.msra.mxu0 0.0
  %907 = vmatpush.msra.mxu0 0.0
  %908 = vmatpush.msra.mxu0 0.0
  %909 = vmatpush.msra.mxu0 0.0
  %910 = vmatpush.msra.mxu0 0.0
  %911 = vmatpush.msra.mxu0 0.0
  %912 = vmatpush.msra.mxu0 0.0
  %913 = vmatpush.msra.mxu0 0.0
  %914 = vmatpush.msra.mxu0 0.0
  %915 = vmatpush.msra.mxu0 0.0
  %916 = vmatpush.msra.mxu0 0.0
  %917 = vmatpush.msra.mxu0 0.0
  %918 = vmatpush.msra.mxu0 0.0
  %919 = vmatpush.msra.mxu0 %v633
  %920 = vmatpush.msra.mxu0 %v632
  %921 = vmatmul.f32.gmra.mxu0 %v903
  %v922 = vpop.f32.mrf.mxu0
  %v923 = vadd.f32 %v637, %v922
  %924 = vdwg.mxu0
  %v925 = vadd.f32 %v627, %v582
  %v926 = vadd.f32 %v925, %v923
  %v927 = vxor.u32 %v926, 2147483648
  %v928 = vmul.f32 %v927, 1.442695
  %v929 = vpow.pop %v928
  %v930 = vadd.f32 %v929, 1.0
  %v931 = vrcp.pop %v930
  %v932 = vmul.f32 %v930, %v931
  %v933 = vsub.f32 1.0, %v932
  %v934 = vmul.f32 %v931, %v933
  %v935 = vadd.f32 %v931, %v934
  %vm936 = vweird.f32 %v930
  %vm937 = vweird.f32 %v931
  %vm938 = vmor %vm936, %vm937
  %v939 = vsel %vm938, %v931, %v935
  %v940 = vand.u32 2147483647, %v930
  %vm941 = vcmp.eq.f32.partialorder %v940, 8.507059e+37
  %v942 = vand.u32 %v930, 2147483648
  %v943 = vor.u32 1.1754944e-38, %v942
  %v944 = vsel %vm941, %v943, %v939
  %v945 = vmul.f32 1.0, %v944
  %947 = vrot.lane.b32.xlu0 %v923, 112
  %v948 = vpop.permute.xlu0 %947
  %v950 = vmul.f32 %v945, %v948
  %952 = vrot.lane.b32.xlu0 %v950, 16
  %v953 = vpop.permute.xlu0 %952
  %v955 = vadd.f32 %v925, %v953
  %v956 = vtanh.pop %v955
  %v957 = vsub.f32 1.0, %v945
  %959 = vrot.lane.b32.xlu0 %v956, 120
  %v960 = vpop.permute.xlu0 %959
  %v962 = vmul.f32 %v957, %v960
  %v963 = vmul.f32 %v945, %v833
  %v964 = vadd.f32 %v962, %v963
  %966 = vrot.lane.b32.xlu0 %v964, 120
  %v967 = vpop.permute.xlu0 %966
  %v968 = vsel %vm705, %v967, 0
  %970 = vmatpush.msra.mxu0 0.0
  %971 = vmatpush.msra.mxu0 0.0
  %972 = vmatpush.msra.mxu0 0.0
  %973 = vmatpush.msra.mxu0 0.0
  %974 = vmatpush.msra.mxu0 0.0
  %975 = vmatpush.msra.mxu0 0.0
  %976 = vmatpush.msra.mxu0 0.0
  %977 = vmatpush.msra.mxu0 0.0
  %978 = vmatpush.msra.mxu0 0.0
  %979 = vmatpush.msra.mxu0 0.0
  %980 = vmatpush.msra.mxu0 0.0
  %981 = vmatpush.msra.mxu0 0.0
  %982 = vmatpush.msra.mxu0 0.0
  %983 = vmatpush.msra.mxu0 0.0
  %984 = vmatpush.msra.mxu0 0.0
  %985 = vmatpush.msra.mxu0 %v635
  %986 = vmatmul.f32.gmra.mxu0 %v968
  %v987 = vpop.f32.mrf.mxu0
  %v988 = vadd.f32 %v701, %v987
  %989 = vdwg.mxu0
  %990 = vrot.lane.b32.xlu0 %v923, 104
  %v991 = vpop.permute.xlu0 %990
  %v993 = vadd.f32 %v988, %v991
  %v994 = vxor.u32 %v993, 2147483648
  %v995 = vmul.f32 %v994, 1.442695
  %v996 = vpow.pop %v995
  %v997 = vadd.f32 %v996, 1.0
  %v998 = vrcp.pop %v997
  %v999 = vmul.f32 %v997, %v998
  %v1000 = vsub.f32 1.0, %v999
  %v1001 = vmul.f32 %v998, %v1000
  %v1002 = vadd.f32 %v998, %v1001
  %vm1003 = vweird.f32 %v997
  %vm1004 = vweird.f32 %v998
  %vm1005 = vmor %vm1003, %vm1004
  %v1006 = vsel %vm1005, %v998, %v1002
  %v1007 = vand.u32 2147483647, %v997
  %vm1008 = vcmp.eq.f32.partialorder %v1007, 8.507059e+37
  %v1009 = vand.u32 %v997, 2147483648
  %v1010 = vor.u32 1.1754944e-38, %v1009
  %v1011 = vsel %vm1008, %v1010, %v1006
  %v1012 = vmul.f32 1.0, %v1011
  %1013 = vrot.lane.b32.xlu0 %v923, 88
  %v1014 = vpop.permute.xlu0 %1013
  %v1016 = vmul.f32 %v1012, %v1014
  %1018 = vrot.lane.b32.xlu0 %v1016, 16
  %v1019 = vpop.permute.xlu0 %1018
  %v1021 = vadd.f32 %v988, %v1019
  %v1022 = vtanh.pop %v1021
  %v1023 = vsub.f32 1.0, %v1012
  %1025 = vrot.lane.b32.xlu0 %v1022, 120
  %v1026 = vpop.permute.xlu0 %1025
  %v1028 = vmul.f32 %v1023, %v1026
  %v1029 = vmul.f32 %v1012, %v899
  %v1030 = vadd.f32 %v1028, %v1029
  %v1032 = vsel %vm705, %v967, %v1030
  %v1034 = vsel %vm590, %v1032, 0
  %1036 = vmatpush.msra.mxu0 0.0
  %1037 = vmatpush.msra.mxu0 0.0
  %1038 = vmatpush.msra.mxu0 0.0
  %1039 = vmatpush.msra.mxu0 0.0
  %1040 = vmatpush.msra.mxu0 0.0
  %1041 = vmatpush.msra.mxu0 0.0
  %1042 = vmatpush.msra.mxu0 0.0
  %1043 = vmatpush.msra.mxu0 0.0
  %1044 = vmatpush.msra.mxu0 0.0
  %1045 = vmatpush.msra.mxu0 0.0
  %1046 = vmatpush.msra.mxu0 0.0
  %1047 = vmatpush.msra.mxu0 0.0
  %1048 = vmatpush.msra.mxu0 0.0
  %1049 = vmatpush.msra.mxu0 0.0
  %1050 = vmatpush.msra.mxu0 %v633
  %1051 = vmatpush.msra.mxu0 %v632
  %1052 = vmatmul.f32.gmra.mxu0 %v1034
  %v1053 = vpop.f32.mrf.mxu0
  %v1054 = vadd.f32 %v637, %v1053
  %1055 = vdwg.mxu0
  %v1056 = vadd.f32 %v630, %v582
  %v1057 = vadd.f32 %v1056, %v1054
  %v1058 = vxor.u32 %v1057, 2147483648
  %v1059 = vmul.f32 %v1058, 1.442695
  %v1060 = vpow.pop %v1059
  %v1061 = vadd.f32 %v1060, 1.0
  %v1062 = vrcp.pop %v1061
  %v1063 = vmul.f32 %v1061, %v1062
  %v1064 = vsub.f32 1.0, %v1063
  %v1065 = vmul.f32 %v1062, %v1064
  %v1066 = vadd.f32 %v1062, %v1065
  %vm1067 = vweird.f32 %v1061
  %vm1068 = vweird.f32 %v1062
  %vm1069 = vmor %vm1067, %vm1068
  %v1070 = vsel %vm1069, %v1062, %v1066
  %v1071 = vand.u32 2147483647, %v1061
  %vm1072 = vcmp.eq.f32.partialorder %v1071, 8.507059e+37
  %v1073 = vand.u32 %v1061, 2147483648
  %v1074 = vor.u32 1.1754944e-38, %v1073
  %v1075 = vsel %vm1072, %v1074, %v1070
  %v1076 = vmul.f32 1.0, %v1075
  %1078 = vrot.lane.b32.xlu0 %v1054, 112
  %v1079 = vpop.permute.xlu0 %1078
  %v1081 = vmul.f32 %v1076, %v1079
  %1083 = vrot.lane.b32.xlu0 %v1081, 16
  %v1084 = vpop.permute.xlu0 %1083
  %v1086 = vadd.f32 %v1056, %v1084
  %v1087 = vtanh.pop %v1086
  %v1088 = vsub.f32 1.0, %v1076
  %1090 = vrot.lane.b32.xlu0 %v1087, 120
  %v1091 = vpop.permute.xlu0 %1090
  %v1093 = vmul.f32 %v1088, %v1091
  %v1094 = vmul.f32 %v1076, %v964
  %v1095 = vadd.f32 %v1093, %v1094
  %1097 = vrot.lane.b32.xlu0 %v1095, 120
  %v1098 = vpop.permute.xlu0 %1097
  %v1099 = vsel %vm705, %v1098, 0
  %1101 = vmatpush.msra.mxu0 0.0
  %1102 = vmatpush.msra.mxu0 0.0
  %1103 = vmatpush.msra.mxu0 0.0
  %1104 = vmatpush.msra.mxu0 0.0
  %1105 = vmatpush.msra.mxu0 0.0
  %1106 = vmatpush.msra.mxu0 0.0
  %1107 = vmatpush.msra.mxu0 0.0
  %1108 = vmatpush.msra.mxu0 0.0
  %1109 = vmatpush.msra.mxu0 0.0
  %1110 = vmatpush.msra.mxu0 0.0
  %1111 = vmatpush.msra.mxu0 0.0
  %1112 = vmatpush.msra.mxu0 0.0
  %1113 = vmatpush.msra.mxu0 0.0
  %1114 = vmatpush.msra.mxu0 0.0
  %1115 = vmatpush.msra.mxu0 0.0
  %1116 = vmatpush.msra.mxu0 %v635
  %1117 = vmatmul.f32.gmra.mxu0 %v1099
  %v1118 = vpop.f32.mrf.mxu0
  %v1119 = vadd.f32 %v701, %v1118
  %1120 = vdwg.mxu0
  %1121 = vrot.lane.b32.xlu0 %v1054, 104
  %v1122 = vpop.permute.xlu0 %1121
  %v1124 = vadd.f32 %v1119, %v1122
  %v1125 = vxor.u32 %v1124, 2147483648
  %v1126 = vmul.f32 %v1125, 1.442695
  %v1127 = vpow.pop %v1126
  %v1128 = vadd.f32 %v1127, 1.0
  %v1129 = vrcp.pop %v1128
  %v1130 = vmul.f32 %v1128, %v1129
  %v1131 = vsub.f32 1.0, %v1130
  %v1132 = vmul.f32 %v1129, %v1131
  %v1133 = vadd.f32 %v1129, %v1132
  %vm1134 = vweird.f32 %v1128
  %vm1135 = vweird.f32 %v1129
  %vm1136 = vmor %vm1134, %vm1135
  %v1137 = vsel %vm1136, %v1129, %v1133
  %v1138 = vand.u32 2147483647, %v1128
  %vm1139 = vcmp.eq.f32.partialorder %v1138, 8.507059e+37
  %v1140 = vand.u32 %v1128, 2147483648
  %v1141 = vor.u32 1.1754944e-38, %v1140
  %v1142 = vsel %vm1139, %v1141, %v1137
  %v1143 = vmul.f32 1.0, %v1142
  %1144 = vrot.lane.b32.xlu0 %v1054, 88
  %v1145 = vpop.permute.xlu0 %1144
  %v1147 = vmul.f32 %v1143, %v1145
  %1149 = vrot.lane.b32.xlu0 %v1147, 16
  %v1150 = vpop.permute.xlu0 %1149
  %v1152 = vadd.f32 %v1119, %v1150
  %v1153 = vtanh.pop %v1152
  %v1154 = vsub.f32 1.0, %v1143
  %1156 = vrot.lane.b32.xlu0 %v1153, 120
  %v1157 = vpop.permute.xlu0 %1156
  %v1159 = vmul.f32 %v1154, %v1157
  %v1160 = vmul.f32 %v1143, %v1030
  %v1161 = vadd.f32 %v1159, %v1160
  %v1163 = vsel %vm705, %v1098, %v1161
  %v1164 = vld [vmem:[%s3 + $0xb0] sm:$0xff]
  %v1165 = vld [vmem:[%s3 + $0xb8] sm:$0xff]
  %v1166 = vld [vmem:[%s3 + $0xc0] sm:$0x1]
  %v1167 = vperm.slane %v1166, 0
  %v1169 = vsel %vm590, %v1163, 0
  %1171 = vmatpush.msra.mxu0 0.0
  %1172 = vmatpush.msra.mxu0 0.0
  %1173 = vmatpush.msra.mxu0 0.0
  %1174 = vmatpush.msra.mxu0 0.0
  %1175 = vmatpush.msra.mxu0 0.0
  %1176 = vmatpush.msra.mxu0 0.0
  %1177 = vmatpush.msra.mxu0 0.0
  %1178 = vmatpush.msra.mxu0 0.0
  %1179 = vmatpush.msra.mxu0 0.0
  %1180 = vmatpush.msra.mxu0 0.0
  %1181 = vmatpush.msra.mxu0 0.0
  %1182 = vmatpush.msra.mxu0 0.0
  %1183 = vmatpush.msra.mxu0 0.0
  %1184 = vmatpush.msra.mxu0 0.0
  %1185 = vmatpush.msra.mxu0 %v1165
  %1186 = vmatpush.msra.mxu0 %v1164
  %1187 = vmatmul.f32.gmra.mxu0 %v1169
  %v1188 = vpop.f32.mrf.mxu0
  %v1189 = vadd.f32 %v1167, %v1188
  %1190 = vdwg.mxu0
  %v1191 = vld [vmem:[%s2] sm:$0xff]
  %v1192 = vld [vmem:[%s3 + $0x90] sm:$0xff]
  %v1193 = vld [vmem:[%s3 + $0x98] sm:$0xff]
  %1195 = vrot.lane.b32.xlu0 %v582, 104
  %v1196 = vpop.permute.xlu0 %1195
  %v1199 = vsel %vm590, %v1191, 0
  %1201 = vmatpush.msra.mxu0 0.0
  %1202 = vmatpush.msra.mxu0 0.0
  %1203 = vmatpush.msra.mxu0 0.0
  %1204 = vmatpush.msra.mxu0 0.0
  %1205 = vmatpush.msra.mxu0 0.0
  %1206 = vmatpush.msra.mxu0 0.0
  %1207 = vmatpush.msra.mxu0 0.0
  %1208 = vmatpush.msra.mxu0 0.0
  %1209 = vmatpush.msra.mxu0 0.0
  %1210 = vmatpush.msra.mxu0 0.0
  %1211 = vmatpush.msra.mxu0 0.0
  %1212 = vmatpush.msra.mxu0 0.0
  %1213 = vmatpush.msra.mxu0 0.0
  %1214 = vmatpush.msra.mxu0 0.0
  %1215 = vmatpush.msra.mxu0 %v1193
  %1216 = vmatpush.msra.mxu0 %v1192
  %1217 = vmatmul.f32.gmra.mxu0 %v1199
  %v1218 = vpop.f32.mrf.mxu0
  %v1219 = vadd.f32 %v1196, %v1218
  %1220 = vdwg.mxu0
  %v1221 = vadd.f32 %v1219, %v1189
  %v1222 = vxor.u32 %v1221, 2147483648
  %v1223 = vmul.f32 %v1222, 1.442695
  %v1224 = vpow.pop %v1223
  %v1225 = vadd.f32 %v1224, 1.0
  %v1226 = vrcp.pop %v1225
  %v1227 = vmul.f32 %v1225, %v1226
  %v1228 = vsub.f32 1.0, %v1227
  %v1229 = vmul.f32 %v1226, %v1228
  %v1230 = vadd.f32 %v1226, %v1229
  %vm1231 = vweird.f32 %v1225
  %vm1232 = vweird.f32 %v1226
  %vm1233 = vmor %vm1231, %vm1232
  %v1234 = vsel %vm1233, %v1226, %v1230
  %v1235 = vand.u32 2147483647, %v1225
  %vm1236 = vcmp.eq.f32.partialorder %v1235, 8.507059e+37
  %v1237 = vand.u32 %v1225, 2147483648
  %v1238 = vor.u32 1.1754944e-38, %v1237
  %v1239 = vsel %vm1236, %v1238, %v1234
  %v1240 = vmul.f32 1.0, %v1239
  %1242 = vrot.lane.b32.xlu0 %v1189, 112
  %v1243 = vpop.permute.xlu0 %1242
  %v1245 = vmul.f32 %v1240, %v1243
  %1247 = vrot.lane.b32.xlu0 %v1245, 16
  %v1248 = vpop.permute.xlu0 %1247
  %v1250 = vadd.f32 %v1219, %v1248
  %v1251 = vtanh.pop %v1250
  %v1252 = vsub.f32 1.0, %v1240
  %1254 = vrot.lane.b32.xlu0 %v1251, 120
  %v1255 = vpop.permute.xlu0 %1254
  %v1257 = vmul.f32 %v1252, %v1255
  %v1258 = vmul.f32 %v1240, %v1095
  %v1259 = vadd.f32 %v1257, %v1258
  %v1260 = vld [vmem:[%s3 + $0xa0] sm:$0xff]
  %v1261 = vld [vmem:[%s3 + $0xa8] sm:$0x1]
  %v1262 = vperm.slane %v1261, 0
  %1264 = vrot.lane.b32.xlu0 %v1259, 120
  %v1265 = vpop.permute.xlu0 %1264
  %v1266 = vsel %vm705, %v1265, 0
  %1268 = vmatpush.msra.mxu0 0.0
  %1269 = vmatpush.msra.mxu0 0.0
  %1270 = vmatpush.msra.mxu0 0.0
  %1271 = vmatpush.msra.mxu0 0.0
  %1272 = vmatpush.msra.mxu0 0.0
  %1273 = vmatpush.msra.mxu0 0.0
  %1274 = vmatpush.msra.mxu0 0.0
  %1275 = vmatpush.msra.mxu0 0.0
  %1276 = vmatpush.msra.mxu0 0.0
  %1277 = vmatpush.msra.mxu0 0.0
  %1278 = vmatpush.msra.mxu0 0.0
  %1279 = vmatpush.msra.mxu0 0.0
  %1280 = vmatpush.msra.mxu0 0.0
  %1281 = vmatpush.msra.mxu0 0.0
  %1282 = vmatpush.msra.mxu0 0.0
  %1283 = vmatpush.msra.mxu0 %v1260
  %1284 = vmatmul.f32.gmra.mxu0 %v1266
  %v1285 = vpop.f32.mrf.mxu0
  %v1286 = vadd.f32 %v1262, %v1285
  %1287 = vdwg.mxu0
  %1288 = vrot.lane.b32.xlu0 %v1189, 104
  %v1289 = vpop.permute.xlu0 %1288
  %v1291 = vadd.f32 %v1286, %v1289
  %v1292 = vxor.u32 %v1291, 2147483648
  %v1293 = vmul.f32 %v1292, 1.442695
  %v1294 = vpow.pop %v1293
  %v1295 = vadd.f32 %v1294, 1.0
  %v1296 = vrcp.pop %v1295
  %v1297 = vmul.f32 %v1295, %v1296
  %v1298 = vsub.f32 1.0, %v1297
  %v1299 = vmul.f32 %v1296, %v1298
  %v1300 = vadd.f32 %v1296, %v1299
  %vm1301 = vweird.f32 %v1295
  %vm1302 = vweird.f32 %v1296
  %vm1303 = vmor %vm1301, %vm1302
  %v1304 = vsel %vm1303, %v1296, %v1300
  %v1305 = vand.u32 2147483647, %v1295
  %vm1306 = vcmp.eq.f32.partialorder %v1305, 8.507059e+37
  %v1307 = vand.u32 %v1295, 2147483648
  %v1308 = vor.u32 1.1754944e-38, %v1307
  %v1309 = vsel %vm1306, %v1308, %v1304
  %v1310 = vmul.f32 1.0, %v1309
  %1311 = vrot.lane.b32.xlu0 %v1189, 88
  %v1312 = vpop.permute.xlu0 %1311
  %v1314 = vmul.f32 %v1310, %v1312
  %1316 = vrot.lane.b32.xlu0 %v1314, 16
  %v1317 = vpop.permute.xlu0 %1316
  %v1319 = vadd.f32 %v1286, %v1317
  %v1320 = vtanh.pop %v1319
  %v1321 = vsub.f32 1.0, %v1310
  %1323 = vrot.lane.b32.xlu0 %v1320, 120
  %v1324 = vpop.permute.xlu0 %1323
  %v1326 = vmul.f32 %v1321, %v1324
  %v1327 = vmul.f32 %v1310, %v1161
  %v1328 = vadd.f32 %v1326, %v1327
  %v1329 = vld [vmem:[%s3 + $0xc8] sm:$0xff]
  %v1330 = vld [vmem:[%s3 + $0xd0] sm:$0x1]
  %v1331 = vperm.slane %v1330, 0
  %1333 = vrot.lane.b32.xlu0 %v1328, 120
  %v1334 = vpop.permute.xlu0 %1333
  %v1335 = vsel %vm705, %v1334, 0
  %1337 = vmatpush.msra.mxu0 0.0
  %1338 = vmatpush.msra.mxu0 0.0
  %1339 = vmatpush.msra.mxu0 0.0
  %1340 = vmatpush.msra.mxu0 0.0
  %1341 = vmatpush.msra.mxu0 0.0
  %1342 = vmatpush.msra.mxu0 0.0
  %1343 = vmatpush.msra.mxu0 0.0
  %1344 = vmatpush.msra.mxu0 0.0
  %1345 = vmatpush.msra.mxu0 0.0
  %1346 = vmatpush.msra.mxu0 0.0
  %1347 = vmatpush.msra.mxu0 0.0
  %1348 = vmatpush.msra.mxu0 0.0
  %1349 = vmatpush.msra.mxu0 0.0
  %1350 = vmatpush.msra.mxu0 0.0
  %1351 = vmatpush.msra.mxu0 0.0
  %1352 = vmatpush.msra.mxu0 %v1329
  %1353 = vmatmul.f32.gmra.mxu0 %v1335
  %v1354 = vpop.f32.mrf.mxu0
  %v1355 = vadd.f32 %v1331, %v1354
  %1356 = vdwg.mxu0
  %1357 = vst [vmem:[%s4] sm:$0xff] %v1355
  // Predicated region
  $region18: #{forward.1} parent=0 // pred_check
    _
  $region19: #{forward.1} parent=0 // pred_check_branch
    %1359 = sbr.rel (0) target = $region21
  $region20: #{forward.1} parent=0 // pred_region
    _
  $region21: #{forward.1} parent=0 // pred_fallthru
    _
  // Predicated region
  $region22: #{forward.1} parent=0 // pred_check
    _
  $region23: #{forward.1} parent=0 // pred_check_branch
    %1361 = sbr.rel (0) target = $region25
  $region24: #{forward.1} parent=0 // pred_region
    _
  $region25: #{forward.1} parent=0 // pred_fallthru
    _

</llo_original>
